<compile_context>
chip_gen: v5e
topology: v5e:2x2
jax: 0.10.0
libtpu: 0.0.40
codegen_flags: <defaults>
</compile_context>

<pallas_src>
import functools

import jax
import jax.numpy as jnp
import numpy as np
from jax import lax
from jax.experimental import pallas as pl
from jax.experimental.pallas import tpu as pltpu


def compute_padding(kernel_size, rate):
    kernel_size_effective = kernel_size + (kernel_size - 1) * (rate - 1)
    pad_total = kernel_size_effective - 1
    pad_beg = pad_total // 2
    pad_end = pad_total - pad_beg
    return pad_beg, pad_end


# ----------------------------------------------------------------------------
# Pallas kernel: fused depthwise(KxK) + pointwise(1x1) for one
# (row-tile, Cout-tile).  The depthwise slab is cached in dw_ref and reused
# across the (innermost) Cout-tile axis.
# ----------------------------------------------------------------------------
def _sepconv_kernel(x_ref, wdw_ref, wpw_ref, b_ref, o_ref, dw_ref, *,
                    K, stride, dilation, TH, Wo):
    # x_ref  : (1, TH_in, Wp, Cin)  bf16  padded + halo'ed input rows
    # wdw_ref: (K*K, Cin)           f32   depthwise taps
    # wpw_ref: (Cin, TC)            bf16  pointwise weight tile
    # b_ref  : (1, TC)              f32   fused (depthwise-folded + pointwise) bias
    # o_ref  : (1, TH, Wo, TC)      f32   output tile
    # dw_ref : (TH*Wo, Cin)         bf16  cached depthwise result (VMEM scratch)
    Cin = x_ref.shape[-1]
    TC = o_ref.shape[-1]

    # Depthwise conv only for the first Cout tile of this spatial tile; the
    # Cout axis is the innermost grid axis (and marked "arbitrary"), so the
    # scratch result is still valid for the remaining Cout tiles.
    @pl.when(pl.program_id(1) == 0)
    def _():
        x = x_ref[0].astype(jnp.float32)              # (TH_in, Wp, Cin)
        wdw = wdw_ref[...]                            # (K*K, Cin)

        w_span = (Wo - 1) * stride + 1
        h_span = (TH - 1) * stride + 1

        dw = jnp.zeros((TH, Wo, Cin), jnp.float32)
        # kw outer: the W (sublane-axis) shift is materialized once per kw,
        # the kh row slices are layout-free.
        for kw in range(K):
            xs = x[:, kw * dilation: kw * dilation + w_span, :]
            if stride > 1:
                xs = xs[:, ::stride, :]
            for kh in range(K):
                rows = xs[kh * dilation: kh * dilation + h_span]
                if stride > 1:
                    rows = rows[::stride]
                w_tap = wdw[kh * K + kw].reshape(1, 1, Cin)
                dw = dw + rows * w_tap                # VPU multiply-add
        # Store already reshaped + cast so per-Cout-tile work is matmul only.
        dw_ref[...] = dw.reshape(TH * Wo, Cin).astype(jnp.bfloat16)

    # pointwise 1x1 conv == (TH*Wo, Cin) @ (Cin, TC) on the MXU,
    # bf16 inputs / f32 accumulation.
    y = jnp.dot(dw_ref[...], wpw_ref[...], preferred_element_type=jnp.float32)
    y = y + b_ref[...]
    o_ref[0] = y.reshape(TH, Wo, TC).astype(o_ref.dtype)


# ----------------------------------------------------------------------------
# Public wrapper: NCHW in / NCHW out, PyTorch weight layouts.
# ----------------------------------------------------------------------------
def separable_conv2d_same(x_nchw, w_dw, w_pw, b_dw=None, b_pw=None, *,
                          stride=1, dilation=1, th=None):
    """SeparableConv2d_same forward.

    x_nchw : (N, Cin, H, W)
    w_dw   : (Cin, 1, K, K)    depthwise Conv2d weight (groups=Cin)
    w_pw   : (Cout, Cin, 1, 1) pointwise Conv2d weight
    b_dw/b_pw : optional (Cin,) / (Cout,) biases (module default: bias=False)
    """
    N, Cin, H, W = x_nchw.shape
    assert w_dw.shape[0] == Cin and w_dw.shape[1] == 1
    K = w_dw.shape[2]
    Cout = w_pw.shape[0]
    assert w_pw.shape == (Cout, Cin, 1, 1)

    # Module uses padding=(pad_beg, pad_beg) on both spatial dims.
    pad, _ = compute_padding(K, dilation)
    Hp, Wp = H + 2 * pad, W + 2 * pad
    span = dilation * (K - 1) + 1
    Ho = (Hp - span) // stride + 1
    Wo = (Wp - span) // stride + 1

    # ---- tiling ------------------------------------------------------------
    if th is None:
        # target matmul-M (= TH*Wo) ~256 rows: amortizes per-grid-step
        # overhead and fills the 256-deep MXU, while the depthwise scratch and
        # output tile stay small in VMEM.
        th = max(1, min(Ho, max(1, 256 // max(1, Wo))))
    TH = th
    HB = -(-Ho // TH)                                     # ceil(Ho / TH)
    TH_in = (TH - 1) * stride + dilation * (K - 1) + 1    # rows incl. halo
    rows_needed = (HB * TH - 1) * stride + dilation * (K - 1) + 1

    TC = 128 if (Cout > 128 and Cout % 128 == 0) else Cout
    CB = Cout // TC

    # ---- layout prep: NCHW -> NHWC, pad + halo fused in one copy, bf16 ------
    x = jnp.transpose(x_nchw, (0, 2, 3, 1)).astype(jnp.bfloat16)
    bot = max(0, rows_needed - Hp)
    x = jnp.pad(x, ((0, 0), (pad, pad + bot), (pad, pad), (0, 0)))
    # Overlapping (halo'ed) row blocks -> plain Blocked BlockSpecs downstream,
    # no in-kernel halo DMA needed; duplication is only (K-1)*dilation rows
    # per block.
    x_blocks = jnp.stack(
        [x[:, h * TH * stride: h * TH * stride + TH_in] for h in range(HB)],
        axis=1)                                           # (N, HB, TH_in, Wp, Cin)
    x_blocks = x_blocks.reshape(N * HB, TH_in, Wp, Cin)

    wdw = jnp.transpose(w_dw[:, 0], (1, 2, 0)).reshape(K * K, Cin)
    wdw = wdw.astype(jnp.float32)
    wpw = jnp.transpose(w_pw[:, :, 0, 0], (1, 0)).astype(jnp.bfloat16)  # (Cin, Cout)

    # Fold the depthwise bias through the pointwise weight so the kernel only
    # needs one per-output-channel bias in the epilogue.
    eff_b = jnp.zeros((Cout,), jnp.float32)
    if b_pw is not None:
        eff_b = eff_b + b_pw.astype(jnp.float32)
    if b_dw is not None:
        eff_b = eff_b + jnp.dot(b_dw.astype(jnp.float32),
                                wpw.astype(jnp.float32))
    eff_b = eff_b.reshape(1, Cout)

    kernel = functools.partial(_sepconv_kernel, K=K, stride=stride,
                               dilation=dilation, TH=TH, Wo=Wo)
    out = pl.pallas_call(
        kernel,
        out_shape=jax.ShapeDtypeStruct((N * HB, TH, Wo, Cout), jnp.float32),
        grid_spec=pltpu.PrefetchScalarGridSpec(
            num_scalar_prefetch=0,
            grid=(N * HB, CB),
            in_specs=[
                pl.BlockSpec((1, TH_in, Wp, Cin), lambda nb, cb: (nb, 0, 0, 0)),
                pl.BlockSpec((K * K, Cin), lambda nb, cb: (0, 0)),
                pl.BlockSpec((Cin, TC), lambda nb, cb: (0, cb)),
                pl.BlockSpec((1, TC), lambda nb, cb: (0, cb)),
            ],
            out_specs=pl.BlockSpec((1, TH, Wo, TC),
                                   lambda nb, cb: (nb, 0, 0, cb)),
            scratch_shapes=[pltpu.VMEM((TH * Wo, Cin), jnp.bfloat16)],
        ),
        compiler_params=pltpu.CompilerParams(
            # spatial/batch tiles are independent -> shardable across the two
            # v7x TensorCores; the Cout axis carries the cached depthwise
            # scratch, so it must stay "arbitrary" (sequential, innermost).
            dimension_semantics=("parallel", "arbitrary"),
        ),
    )(x_blocks, wdw, wpw, eff_b)

    out = out.reshape(N, HB * TH, Wo, Cout)[:, :Ho]       # drop row padding
    return jnp.transpose(out, (0, 3, 1, 2))               # NHWC -> NCHW


# ----------------------------------------------------------------------------
# Plain-XLA reference (same bf16 operand rounding as the kernel path so the
# check isolates the conv math; accumulation is f32 in both paths).
# ----------------------------------------------------------------------------
def separable_conv2d_same_ref(x_nchw, w_dw, w_pw, b_dw=None, b_pw=None, *,
                              stride=1, dilation=1):
    Cin = x_nchw.shape[1]
    K = w_dw.shape[-1]
    pad, _ = compute_padding(K, dilation)
    x = x_nchw.astype(jnp.bfloat16).astype(jnp.float32)
    wp = w_pw.astype(jnp.bfloat16).astype(jnp.float32)
    y = lax.conv_general_dilated(
        x, w_dw.astype(jnp.float32), (stride, stride),
        [(pad, pad), (pad, pad)], rhs_dilation=(dilation, dilation),
        dimension_numbers=("NCHW", "OIHW", "NCHW"),
        feature_group_count=Cin)
    if b_dw is not None:
        y = y + b_dw.reshape(1, Cin, 1, 1).astype(jnp.float32)
    y = lax.conv_general_dilated(
        y, wp, (1, 1), [(0, 0), (0, 0)],
        dimension_numbers=("NCHW", "OIHW", "NCHW"))
    if b_pw is not None:
        y = y + b_pw.reshape(1, -1, 1, 1).astype(jnp.float32)
    return y


if __name__ == "__main__":
    key = jax.random.PRNGKey(0)
    k1, k2, k3, k4, k5 = jax.random.split(key, 5)

    N, Cin, Cout, H, W, K = 2, 32, 256, 16, 16, 3

    x = jax.random.normal(k1, (N, Cin, H, W), jnp.float32)
    w_dw = jax.random.normal(k2, (Cin, 1, K, K), jnp.float32) * (2.0 / (K * K)) ** 0.5
    w_pw = jax.random.normal(k3, (Cout, Cin, 1, 1), jnp.float32) * (2.0 / Cin) ** 0.5

    # default module config: kernel_size=3, stride=1, dilation=1, bias=False
    out = jax.block_until_ready(separable_conv2d_same(x, w_dw, w_pw))
    assert out.shape == (N, Cout, H, W), out.shape
    ref = jax.block_until_ready(separable_conv2d_same_ref(x, w_dw, w_pw))
    # tolerance covers the bf16 rounding of the depthwise intermediate fed to
    # the MXU (accumulation is f32 in both paths).
    np.testing.assert_allclose(np.asarray(out), np.asarray(ref),
                               rtol=2e-2, atol=5e-2)

    # dilated variant with biases: exercises dilation, halo rows, the
    # fused-bias fold and the cached-depthwise / multi-Cout-tile path.
    b_dw = 0.1 * jax.random.normal(k4, (Cin,), jnp.float32)
    b_pw = 0.1 * jax.random.normal(k5, (Cout,), jnp.float32)
    out2 = jax.block_until_ready(
        separable_conv2d_same(x, w_dw, w_pw, b_dw, b_pw, dilation=2))
    assert out2.shape == (N, Cout, H, W), out2.shape
    ref2 = jax.block_until_ready(
        separable_conv2d_same_ref(x, w_dw, w_pw, b_dw, b_pw, dilation=2))
    np.testing.assert_allclose(np.asarray(out2), np.asarray(ref2),
                               rtol=2e-2, atol=5e-2)

    # TODO(synk): stride > 1 follows the same tap math (static strided slices
    # in-kernel) but is not exercised by this small test.
    print("KERNEL_OK")
</pallas_src>

<mosaic_0001>
module attributes {stable_mosaic.version = 11 : i64} {
  func.func @_sepconv_kernel(%arg0: i32, %arg1: i32, %arg2: memref<1x18x18x32xbf16, #tpu.memory_space<vmem>>, %arg3: memref<9x32xf32, #tpu.memory_space<vmem>>, %arg4: memref<32x128xbf16, #tpu.memory_space<vmem>>, %arg5: memref<1x128xf32, #tpu.memory_space<vmem>>, %arg6: memref<1x16x16x128xf32, #tpu.memory_space<vmem>>, %arg7: memref<256x32xbf16, #tpu.memory_space<vmem>>) attributes {dimension_semantics = [#tpu.dimension_semantics<parallel>, #tpu.dimension_semantics<arbitrary>], iteration_bounds = array<i64: 2, 2>, scalar_prefetch = 0 : i64, scratch_operands = 1 : i64, tpu.core_type = #tpu.core_type<tc>, window_params = [{transform_indices = @transform_0, window_bounds = array<i64: 1, 18, 18, 32>}, {pipeline_mode = #tpu.pipeline_mode<synchronous>, transform_indices = @transform_1, window_bounds = array<i64: 9, 32>}, {transform_indices = @transform_2, window_bounds = array<i64: 32, 128>}, {transform_indices = @transform_3, window_bounds = array<i64: 1, 128>}, {transform_indices = @transform_4, window_bounds = array<i64: 1, 16, 16, 128>}]} {
    %c0_i32 = arith.constant 0 : i32
    %0 = arith.cmpi eq, %arg1, %c0_i32 : i32
    %1 = arith.extui %0 : i1 to i32
    %c0_i32_0 = arith.constant 0 : i32
    %2 = arith.cmpi ne, %1, %c0_i32_0 : i32
    scf.if %2 {
      %c0_10 = arith.constant 0 : index
      %c0_11 = arith.constant 0 : index
      %c0_12 = arith.constant 0 : index
      %c0_13 = arith.constant 0 : index
      %13 = vector.load %arg2[%c0_10, %c0_11, %c0_12, %c0_13] : memref<1x18x18x32xbf16, #tpu.memory_space<vmem>>, vector<1x18x18x32xbf16>
      %14 = vector.shape_cast %13 : vector<1x18x18x32xbf16> to vector<18x18x32xbf16>
      %15 = arith.extf %14 : vector<18x18x32xbf16> to vector<18x18x32xf32>
      %c0_14 = arith.constant 0 : index
      %c0_15 = arith.constant 0 : index
      %16 = vector.load %arg3[%c0_14, %c0_15] : memref<9x32xf32, #tpu.memory_space<vmem>>, vector<9x32xf32>
      %cst_16 = arith.constant 0.000000e+00 : f32
      %17 = vector.broadcast %cst_16 : f32 to vector<16x16x32xf32>
      %18 = vector.extract_strided_slice %15 {offsets = [0, 0, 0], sizes = [18, 16, 32], strides = [1, 1, 1]} : vector<18x18x32xf32> to vector<18x16x32xf32>
      %19 = vector.extract_strided_slice %18 {offsets = [0, 0, 0], sizes = [16, 16, 32], strides = [1, 1, 1]} : vector<18x16x32xf32> to vector<16x16x32xf32>
      %20 = vector.extract_strided_slice %16 {offsets = [0, 0], sizes = [1, 32], strides = [1, 1]} : vector<9x32xf32> to vector<1x32xf32>
      %21 = vector.shape_cast %20 : vector<1x32xf32> to vector<32xf32>
      %22 = vector.shape_cast %21 : vector<32xf32> to vector<1x1x32xf32>
      %23 = vector.broadcast %22 : vector<1x1x32xf32> to vector<16x16x32xf32>
      %24 = arith.mulf %19, %23 : vector<16x16x32xf32>
      %25 = arith.addf %17, %24 : vector<16x16x32xf32>
      %26 = vector.extract_strided_slice %18 {offsets = [1, 0, 0], sizes = [16, 16, 32], strides = [1, 1, 1]} : vector<18x16x32xf32> to vector<16x16x32xf32>
      %27 = vector.extract_strided_slice %16 {offsets = [3, 0], sizes = [1, 32], strides = [1, 1]} : vector<9x32xf32> to vector<1x32xf32>
      %28 = vector.shape_cast %27 : vector<1x32xf32> to vector<32xf32>
      %29 = vector.shape_cast %28 : vector<32xf32> to vector<1x1x32xf32>
      %30 = vector.broadcast %29 : vector<1x1x32xf32> to vector<16x16x32xf32>
      %31 = arith.mulf %26, %30 : vector<16x16x32xf32>
      %32 = arith.addf %25, %31 : vector<16x16x32xf32>
      %33 = vector.extract_strided_slice %18 {offsets = [2, 0, 0], sizes = [16, 16, 32], strides = [1, 1, 1]} : vector<18x16x32xf32> to vector<16x16x32xf32>
      %34 = vector.extract_strided_slice %16 {offsets = [6, 0], sizes = [1, 32], strides = [1, 1]} : vector<9x32xf32> to vector<1x32xf32>
      %35 = vector.shape_cast %34 : vector<1x32xf32> to vector<32xf32>
      %36 = vector.shape_cast %35 : vector<32xf32> to vector<1x1x32xf32>
      %37 = vector.broadcast %36 : vector<1x1x32xf32> to vector<16x16x32xf32>
      %38 = arith.mulf %33, %37 : vector<16x16x32xf32>
      %39 = arith.addf %32, %38 : vector<16x16x32xf32>
      %40 = vector.extract_strided_slice %15 {offsets = [0, 1, 0], sizes = [18, 16, 32], strides = [1, 1, 1]} : vector<18x18x32xf32> to vector<18x16x32xf32>
      %41 = vector.extract_strided_slice %40 {offsets = [0, 0, 0], sizes = [16, 16, 32], strides = [1, 1, 1]} : vector<18x16x32xf32> to vector<16x16x32xf32>
      %42 = vector.extract_strided_slice %16 {offsets = [1, 0], sizes = [1, 32], strides = [1, 1]} : vector<9x32xf32> to vector<1x32xf32>
      %43 = vector.shape_cast %42 : vector<1x32xf32> to vector<32xf32>
      %44 = vector.shape_cast %43 : vector<32xf32> to vector<1x1x32xf32>
      %45 = vector.broadcast %44 : vector<1x1x32xf32> to vector<16x16x32xf32>
      %46 = arith.mulf %41, %45 : vector<16x16x32xf32>
      %47 = arith.addf %39, %46 : vector<16x16x32xf32>
      %48 = vector.extract_strided_slice %40 {offsets = [1, 0, 0], sizes = [16, 16, 32], strides = [1, 1, 1]} : vector<18x16x32xf32> to vector<16x16x32xf32>
      %49 = vector.extract_strided_slice %16 {offsets = [4, 0], sizes = [1, 32], strides = [1, 1]} : vector<9x32xf32> to vector<1x32xf32>
      %50 = vector.shape_cast %49 : vector<1x32xf32> to vector<32xf32>
      %51 = vector.shape_cast %50 : vector<32xf32> to vector<1x1x32xf32>
      %52 = vector.broadcast %51 : vector<1x1x32xf32> to vector<16x16x32xf32>
      %53 = arith.mulf %48, %52 : vector<16x16x32xf32>
      %54 = arith.addf %47, %53 : vector<16x16x32xf32>
      %55 = vector.extract_strided_slice %40 {offsets = [2, 0, 0], sizes = [16, 16, 32], strides = [1, 1, 1]} : vector<18x16x32xf32> to vector<16x16x32xf32>
      %56 = vector.extract_strided_slice %16 {offsets = [7, 0], sizes = [1, 32], strides = [1, 1]} : vector<9x32xf32> to vector<1x32xf32>
      %57 = vector.shape_cast %56 : vector<1x32xf32> to vector<32xf32>
      %58 = vector.shape_cast %57 : vector<32xf32> to vector<1x1x32xf32>
      %59 = vector.broadcast %58 : vector<1x1x32xf32> to vector<16x16x32xf32>
      %60 = arith.mulf %55, %59 : vector<16x16x32xf32>
      %61 = arith.addf %54, %60 : vector<16x16x32xf32>
      %62 = vector.extract_strided_slice %15 {offsets = [0, 2, 0], sizes = [18, 16, 32], strides = [1, 1, 1]} : vector<18x18x32xf32> to vector<18x16x32xf32>
      %63 = vector.extract_strided_slice %62 {offsets = [0, 0, 0], sizes = [16, 16, 32], strides = [1, 1, 1]} : vector<18x16x32xf32> to vector<16x16x32xf32>
      %64 = vector.extract_strided_slice %16 {offsets = [2, 0], sizes = [1, 32], strides = [1, 1]} : vector<9x32xf32> to vector<1x32xf32>
      %65 = vector.shape_cast %64 : vector<1x32xf32> to vector<32xf32>
      %66 = vector.shape_cast %65 : vector<32xf32> to vector<1x1x32xf32>
      %67 = vector.broadcast %66 : vector<1x1x32xf32> to vector<16x16x32xf32>
      %68 = arith.mulf %63, %67 : vector<16x16x32xf32>
      %69 = arith.addf %61, %68 : vector<16x16x32xf32>
      %70 = vector.extract_strided_slice %62 {offsets = [1, 0, 0], sizes = [16, 16, 32], strides = [1, 1, 1]} : vector<18x16x32xf32> to vector<16x16x32xf32>
      %71 = vector.extract_strided_slice %16 {offsets = [5, 0], sizes = [1, 32], strides = [1, 1]} : vector<9x32xf32> to vector<1x32xf32>
      %72 = vector.shape_cast %71 : vector<1x32xf32> to vector<32xf32>
      %73 = vector.shape_cast %72 : vector<32xf32> to vector<1x1x32xf32>
      %74 = vector.broadcast %73 : vector<1x1x32xf32> to vector<16x16x32xf32>
      %75 = arith.mulf %70, %74 : vector<16x16x32xf32>
      %76 = arith.addf %69, %75 : vector<16x16x32xf32>
      %77 = vector.extract_strided_slice %62 {offsets = [2, 0, 0], sizes = [16, 16, 32], strides = [1, 1, 1]} : vector<18x16x32xf32> to vector<16x16x32xf32>
      %78 = vector.extract_strided_slice %16 {offsets = [8, 0], sizes = [1, 32], strides = [1, 1]} : vector<9x32xf32> to vector<1x32xf32>
      %79 = vector.shape_cast %78 : vector<1x32xf32> to vector<32xf32>
      %80 = vector.shape_cast %79 : vector<32xf32> to vector<1x1x32xf32>
      %81 = vector.broadcast %80 : vector<1x1x32xf32> to vector<16x16x32xf32>
      %82 = arith.mulf %77, %81 : vector<16x16x32xf32>
      %83 = arith.addf %76, %82 : vector<16x16x32xf32>
      %84 = vector.shape_cast %83 : vector<16x16x32xf32> to vector<256x32xf32>
      %85 = arith.truncf %84 : vector<256x32xf32> to vector<256x32xbf16>
      %c0_17 = arith.constant 0 : index
      %c0_18 = arith.constant 0 : index
      %86 = vector.load %arg7[%c0_17, %c0_18] : memref<256x32xbf16, #tpu.memory_space<vmem>>, vector<256x32xbf16>
      tpu.vector_store %arg7[%c0_17, %c0_18], %85 {strides = array<i32>} : memref<256x32xbf16, #tpu.memory_space<vmem>>, vector<256x32xbf16>,
    } else {
    }
    %c0 = arith.constant 0 : index
    %c0_1 = arith.constant 0 : index
    %3 = vector.load %arg7[%c0, %c0_1] : memref<256x32xbf16, #tpu.memory_space<vmem>>, vector<256x32xbf16>
    %c0_2 = arith.constant 0 : index
    %c0_3 = arith.constant 0 : index
    %4 = vector.load %arg4[%c0_2, %c0_3] : memref<32x128xbf16, #tpu.memory_space<vmem>>, vector<32x128xbf16>
    %cst = arith.constant dense<0.000000e+00> : vector<256x128xf32>
    %5 = tpu.matmul %3, %4, %cst {dimension_numbers = #tpu.dot_dimension_numbers<[1], [0], [0], [1], [0, 0, 1, 1], [], []>} : vector<256x32xbf16>, vector<32x128xbf16>, vector<256x128xf32> -> vector<256x128xf32>
    %c0_4 = arith.constant 0 : index
    %c0_5 = arith.constant 0 : index
    %6 = vector.load %arg5[%c0_4, %c0_5] : memref<1x128xf32, #tpu.memory_space<vmem>>, vector<1x128xf32>
    %7 = vector.broadcast %6 : vector<1x128xf32> to vector<256x128xf32>
    %8 = arith.addf %5, %7 : vector<256x128xf32>
    %9 = vector.shape_cast %8 : vector<256x128xf32> to vector<16x16x128xf32>
    %c0_6 = arith.constant 0 : index
    %c0_7 = arith.constant 0 : index
    %c0_8 = arith.constant 0 : index
    %c0_9 = arith.constant 0 : index
    %10 = vector.load %arg6[%c0_6, %c0_7, %c0_8, %c0_9] : memref<1x16x16x128xf32, #tpu.memory_space<vmem>>, vector<1x16x16x128xf32>
    %11 = vector.shape_cast %10 : vector<1x16x16x128xf32> to vector<16x16x128xf32>
    %12 = vector.shape_cast %9 : vector<16x16x128xf32> to vector<1x16x16x128xf32>
    tpu.vector_store %arg6[%c0_6, %c0_7, %c0_8, %c0_9], %12 {strides = array<i32>} : memref<1x16x16x128xf32, #tpu.memory_space<vmem>>, vector<1x16x16x128xf32>,
    return
  }
  func.func @transform_0(%arg0: i32, %arg1: i32) -> (i32, i32, i32, i32) {
    %c0_i32 = arith.constant 0 : i32
    %c0_i32_0 = arith.constant 0 : i32
    %c0_i32_1 = arith.constant 0 : i32
    %c0_i32_2 = arith.constant 0 : i32
    return %arg0, %c0_i32, %c0_i32_0, %c0_i32_1 : i32, i32, i32, i32
  }
  func.func @transform_1(%arg0: i32, %arg1: i32) -> (i32, i32) {
    %c0_i32 = arith.constant 0 : i32
    %c0_i32_0 = arith.constant 0 : i32
    %c0_i32_1 = arith.constant 0 : i32
    return %c0_i32, %c0_i32_0 : i32, i32
  }
  func.func @transform_2(%arg0: i32, %arg1: i32) -> (i32, i32) {
    %c0_i32 = arith.constant 0 : i32
    %c0_i32_0 = arith.constant 0 : i32
    return %c0_i32, %arg1 : i32, i32
  }
  func.func @transform_3(%arg0: i32, %arg1: i32) -> (i32, i32) {
    %c0_i32 = arith.constant 0 : i32
    %c0_i32_0 = arith.constant 0 : i32
    return %c0_i32, %arg1 : i32, i32
  }
  func.func @transform_4(%arg0: i32, %arg1: i32) -> (i32, i32, i32, i32) {
    %c0_i32 = arith.constant 0 : i32
    %c0_i32_0 = arith.constant 0 : i32
    %c0_i32_1 = arith.constant 0 : i32
    return %arg0, %c0_i32, %c0_i32_0, %arg1 : i32, i32, i32, i32
  }
}

</mosaic_0001>

<llo_original>
// kernel: tpu_custom_call.1
$region0: #{tpu_custom_call.1}
  #allocation0 [shape = 'u32[]', space=smem, size = 0x4, offset = 0x4, fixed_abs, tag = 'smem constant byte address 0x4 - core index']
  #allocation1 [shape = 'u32[72,128]{1,0:T(1,128)}', space=vmem, size = 0x9000, scoped, tag = 'internal scratch']
  #allocation2 [shape = 'bf16[256,32]{1,0:T(8,128)(2,1)}', space=vmem, size = 0x10000, scoped, tag = 'scratch operand']
  %s0 = inlined_call_operand.vmem [shape: bf16[2,18,18,32], index: 0, kind: input, shape index: {}]
  %s1 = inlined_call_operand.vmem [shape: f32[9,32], index: 1, kind: input, shape index: {}]
  %s2 = inlined_call_operand.vmem [shape: bf16[32,256], index: 2, kind: input, shape index: {}]
  %s3 = inlined_call_operand.vmem [shape: f32[1,256], index: 3, kind: input, shape index: {}]
  %s4 = inlined_call_operand.hbm [shape: f32[2,16,16,256], index: 4, kind: output, shape index: {}]
  %s5 = sld [smem:[#allocation0]]
  $region94: #{tpu_custom_call.1} parent=0
    _
  %s7 = ssub.s32 1, %s5
  %s8 = scalar_select 0, %s7, %s5
  $region1: #{tpu_custom_call.1} parent=0
    #allocation3 [shape = 'u8[16384]{0}', space=vmem, size = 0x4000, scoped, tag = 'input window, operand 2']
    #allocation4 [shape = 'u8[262144]{0}', space=vmem, size = 0x40000, scoped, tag = 'output window, operand 0']
    #allocation5 [shape = 's32[2]{0}', space=sflag, size = 0x8, scoped, tag = 'scoped memory for tpu_custom_call.1']
    %9 = vsyncpa [#allocation5], 0
    %s10 = scalar_lea.sflag [#allocation5], 1
    %11 = vsyncpa %s10, 0
    loop: start=0, step=1, limit=6
    $region2: #{tpu_custom_call.1} parent=1 // loop_pre_header
      _
    $region3: #{tpu_custom_call.1} parent=1 // loop_header
      %s13 = sphi 0, %s17
      %p14 = scmp.ge.s32.totalorder %s13, 6
      %s20 = sphi 0, %s32
      %s21 = sphi 0, %s28
      %s22 = sphi 0, %s20
      %s23 = sphi 0, %s21
      %s24 = sphi 0, %s22
      %s25 = sphi 0, %s23
      %s35 = sphi 0, %s37
      %s38 = sphi 0, %s35
      %s39 = sphi 0, %s38
      %s55 = sphi 0, %s39
      %s59 = sphi 0, %s59
      %s61 = sphi 0, %s59
      %s62 = sphi 0, %s61
      %s76 = sphi 0, %s62
      %s82 = sphi 0, %s84
      %s85 = sphi 0, %s82
      %s86 = sphi 0, %s85
      %s102 = sphi 0, %s86
      %s108 = sphi 0, %s110
      %s111 = sphi 0, %s108
      %s112 = sphi 0, %s111
      %s128 = sphi 0, %s112
      %s136 = sphi 0, %s138
      %s139 = sphi 0, %s136
      %s140 = sphi 0, %s139
      %s156 = sphi 0, %s140
    $region4: #{tpu_custom_call.1} parent=1 // loop_header_branch
      %16 = sbr.rel (%p14) target = $region8
    $region5: #{tpu_custom_call.1} parent=1 // loop_body
      %s18 = ssub.s32 %s13, 1
      %s19 = ssub.s32 %s13, 2
      %s26 = sadd.s32 1, %s21
      %p27 = scmp.ge.s32.totalorder %s26, 2
      %s28 = scalar_select %p27, 0, %s26
      %s29 = sadd.s32 1, %s20
      %s30 = scalar_select %p27, %s29, %s20
      %p31 = scmp.ge.s32.totalorder %s30, 2
      %s32 = scalar_select %p31, 0, %s30
      %s33 = ssub.s32 %s20, %s32
      %p34 = scmp.eq.s32.totalorder %s33, 0
      %s36 = sadd.s32 %s35, 1
      %s37 = scalar_select %p34, %s35, %s36
      %p40 = pneg %p34
      %p41 = scmp.eq.s32.totalorder %s13, 3
      %p42 = por %p40, %p41
      %p43 = scmp.ne.s32.totalorder %s35, %s38
      %p44 = scmp.eq.s32.totalorder %s13, 0
      %p45 = por %p43, %p44
      %p46 = scmp.ne.s32.totalorder %s35, %s38
      %p47 = scmp.eq.s32.totalorder %s18, 3
      %p48 = por %p46, %p47
      %p49 = scmp.ne.s32.totalorder %s38, %s39
      %p50 = scmp.eq.s32.totalorder %s18, 0
      %p51 = por %p49, %p50
      %p52 = scmp.ne.s32.totalorder %s38, %s39
      %p53 = scmp.eq.s32.totalorder %s19, 3
      %p54 = por %p52, %p53
      %p56 = scmp.ne.s32.totalorder %s39, %s55
      %p57 = scmp.eq.s32.totalorder %s19, 0
      %p58 = por %p56, %p57
      %s60 = sadd.s32 %s59, 1
      %p63 = scmp.eq.s32.totalorder %s13, 3
      %p64 = scmp.ne.s32.totalorder %s59, %s61
      %p65 = scmp.eq.s32.totalorder %s13, 0
      %p66 = por %p64, %p65
      %p67 = scmp.ne.s32.totalorder %s59, %s61
      %p68 = scmp.eq.s32.totalorder %s18, 3
      %p69 = por %p67, %p68
      %p70 = scmp.ne.s32.totalorder %s61, %s62
      %p71 = scmp.eq.s32.totalorder %s18, 0
      %p72 = por %p70, %p71
      %p73 = scmp.ne.s32.totalorder %s61, %s62
      %p74 = scmp.eq.s32.totalorder %s19, 3
      %p75 = por %p73, %p74
      %p77 = scmp.ne.s32.totalorder %s62, %s76
      %p78 = scmp.eq.s32.totalorder %s19, 0
      %p79 = por %p77, %p78
      %s80 = ssub.s32 %s21, %s28
      %p81 = scmp.eq.s32.totalorder %s80, 0
      %s83 = sadd.s32 %s82, 1
      %s84 = scalar_select %p81, %s82, %s83
      %p87 = pneg %p81
      %p88 = scmp.eq.s32.totalorder %s13, 3
      %p89 = por %p87, %p88
      %p90 = scmp.ne.s32.totalorder %s82, %s85
      %p91 = scmp.eq.s32.totalorder %s13, 0
      %p92 = por %p90, %p91
      %p93 = scmp.ne.s32.totalorder %s82, %s85
      %p94 = scmp.eq.s32.totalorder %s18, 3
      %p95 = por %p93, %p94
      %p96 = scmp.ne.s32.totalorder %s85, %s86
      %p97 = scmp.eq.s32.totalorder %s18, 0
      %p98 = por %p96, %p97
      %p99 = scmp.ne.s32.totalorder %s85, %s86
      %p100 = scmp.eq.s32.totalorder %s19, 3
      %p101 = por %p99, %p100
      %p103 = scmp.ne.s32.totalorder %s86, %s102
      %p104 = scmp.eq.s32.totalorder %s19, 0
      %p105 = por %p103, %p104
      %s106 = ssub.s32 %s21, %s28
      %p107 = scmp.eq.s32.totalorder %s106, 0
      %s109 = sadd.s32 %s108, 1
      %s110 = scalar_select %p107, %s108, %s109
      %p113 = pneg %p107
      %p114 = scmp.eq.s32.totalorder %s13, 3
      %p115 = por %p113, %p114
      %p116 = scmp.ne.s32.totalorder %s108, %s111
      %p117 = scmp.eq.s32.totalorder %s13, 0
      %p118 = por %p116, %p117
      %p119 = scmp.ne.s32.totalorder %s108, %s111
      %p120 = scmp.eq.s32.totalorder %s18, 3
      %p121 = por %p119, %p120
      %p122 = scmp.ne.s32.totalorder %s111, %s112
      %p123 = scmp.eq.s32.totalorder %s18, 0
      %p124 = por %p122, %p123
      %p125 = scmp.ne.s32.totalorder %s111, %s112
      %p126 = scmp.eq.s32.totalorder %s19, 3
      %p127 = por %p125, %p126
      %p129 = scmp.ne.s32.totalorder %s112, %s128
      %p130 = scmp.eq.s32.totalorder %s19, 0
      %p131 = por %p129, %p130
      %s132 = ssub.s32 %s20, %s32
      %s133 = ssub.s32 %s21, %s28
      %s134 = sor.u32 %s132, %s133
      %p135 = scmp.eq.s32.totalorder %s134, 0
      %s137 = sadd.s32 %s136, 1
      %s138 = scalar_select %p135, %s136, %s137
      %p141 = pneg %p135
      %p142 = scmp.eq.s32.totalorder %s13, 3
      %p143 = por %p141, %p142
      %p144 = scmp.ne.s32.totalorder %s136, %s139
      %p145 = scmp.eq.s32.totalorder %s13, 0
      %p146 = por %p144, %p145
      %p147 = scmp.ne.s32.totalorder %s136, %s139
      %p148 = scmp.eq.s32.totalorder %s18, 3
      %p149 = por %p147, %p148
      %p150 = scmp.ne.s32.totalorder %s139, %s140
      %p151 = scmp.eq.s32.totalorder %s18, 0
      %p152 = por %p150, %p151
      %p153 = scmp.ne.s32.totalorder %s139, %s140
      %p154 = scmp.eq.s32.totalorder %s19, 3
      %p155 = por %p153, %p154
      %p157 = scmp.ne.s32.totalorder %s140, %s156
      %p158 = scmp.eq.s32.totalorder %s19, 0
      %p159 = por %p157, %p158
      %p160 = scmp.le.s32.totalorder 1, %s13
      %p161 = scmp.lt.s32.totalorder %s13, 5
      %p162 = pnand %p160, %p161
      %p163 = pneg %p162
      // Predicated region
      $region9: #{tpu_custom_call.1} parent=5 // pred_check
        _
      $region10: #{tpu_custom_call.1} parent=5 // pred_check_branch
        %165 = sbr.rel (%p162) target = $region12
      $region11: #{tpu_custom_call.1} parent=5 // pred_region
        %s166 = ssub.s32 %s13, 1
        // Predicated region
        $region13: #{tpu_custom_call.1} parent=11 // pred_check
          %p167 = pneg %p72
        $region14: #{tpu_custom_call.1} parent=11 // pred_check_branch
          %169 = sbr.rel (%p167) target = $region16
        $region15: #{tpu_custom_call.1} parent=11 // pred_region
          _
        $region16: #{tpu_custom_call.1} parent=11 // pred_fallthru
          _
      $region12: #{tpu_custom_call.1} parent=5 // pred_fallthru
        _
      %p170 = scmp.lt.s32.totalorder %s13, 4
      // Predicated region
      $region17: #{tpu_custom_call.1} parent=5 // pred_check
        %p171 = pneg %p170
      $region18: #{tpu_custom_call.1} parent=5 // pred_check_branch
        %173 = sbr.rel (%p171) target = $region20
      $region19: #{tpu_custom_call.1} parent=5 // pred_region
        // Predicated region
        $region21: #{tpu_custom_call.1} parent=19 // pred_check
          %p174 = pneg %p45
        $region22: #{tpu_custom_call.1} parent=19 // pred_check_branch
          %176 = sbr.rel (%p174) target = $region24
        $region23: #{tpu_custom_call.1} parent=19 // pred_region
          %p177 = scmp.lt.s32.totalorder %s20, 1
          %s178 = scalar_select %p177, %s20, 1
          %s179 = smul.addr %s178, 54
          %s180 = smul.addr %s179, 4
          %s181 = scalar_lea.vmem %s0, %s180
        $region24: #{tpu_custom_call.1} parent=19 // pred_fallthru
          _
        // Predicated region
        $region25: #{tpu_custom_call.1} parent=19 // pred_check
          %p182 = pneg %p92
        $region26: #{tpu_custom_call.1} parent=19 // pred_check_branch
          %184 = sbr.rel (%p182) target = $region28
        $region27: #{tpu_custom_call.1} parent=19 // pred_region
          %s185 = sand.u32 %s82, 1
          %s186 = sand.u32 %s82, 1
          %s187 = smul.addr %s186, 16
          %s188 = scalar_lea.vmem [#allocation3], %s187
          %s189 = smul.addr %s21, 4
          %s190 = scalar_lea.vmem %s2, %s189
          // Predicated region
          $region29: #{tpu_custom_call.1} parent=27 // pred_check
            _
          $region30: #{tpu_custom_call.1} parent=27 // pred_check_branch
            %192 = sbr.rel (0) target = $region32
          $region31: #{tpu_custom_call.1} parent=27 // pred_region
            // Predicated region
            $region33: #{tpu_custom_call.1} parent=31 // pred_check
              _
            $region34: #{tpu_custom_call.1} parent=31 // pred_check_branch
              %194 = sbr.rel target = $region36
            $region35: #{tpu_custom_call.1} parent=31 // pred_region
              // Predicated region
              $region48: #{tpu_custom_call.1} parent=35 // pred_check
                _
              $region49: #{tpu_custom_call.1} parent=35 // pred_check_branch
                %216 = sbr.rel (0) target = $region51
              $region50: #{tpu_custom_call.1} parent=35 // pred_region
                loop: start=0, step=1, limit=1
                $region52: #{tpu_custom_call.1} parent=50 // loop_pre_header
                  _
                $region53: #{tpu_custom_call.1} parent=50 // loop_header
                  %s218 = sphi 0, %s222
                  %p219 = scmp.ge.s32.totalorder %s218, 1
                  %s223 = sphi %s190, %s190
                  %s224 = sphi %s188, %s188
                $region54: #{tpu_custom_call.1} parent=50 // loop_header_branch
                  %221 = sbr.rel (%p219) target = $region58
                $region55: #{tpu_custom_call.1} parent=50 // loop_body
                  _
                $region56: #{tpu_custom_call.1} parent=50 // loop_footer
                  %s222 = sadd.s32 1, %s218
                $region57: #{tpu_custom_call.1} parent=50 // loop_footer_branch
                  %217 = sbr.rel target = $region53
                $region58: #{tpu_custom_call.1} parent=50 // loop_exit
                  _
                %s226 = ssub.s32 16, 1
                loop: start=0, step=1, limit=1
                $region59: #{tpu_custom_call.1} parent=50 // loop_pre_header
                  _
                $region60: #{tpu_custom_call.1} parent=50 // loop_header
                  %s228 = sphi 0, %s232
                  %p229 = scmp.ge.s32.totalorder %s228, 1
                  %s233 = sphi %s190, %s190
                  %s234 = sphi %s188, %s188
                $region61: #{tpu_custom_call.1} parent=50 // loop_header_branch
                  %231 = sbr.rel (%p229) target = $region65
                $region62: #{tpu_custom_call.1} parent=50 // loop_body
                  %v235 = vld [vmem:[%s233] sm:%s226]
                  %236 = vst [vmem:[%s234] sm:%s226] %v235
                  %v237 = vld [vmem:[%s233 + $0x8] sm:%s226]
                  %238 = vst [vmem:[%s234 + $0x4] sm:%s226] %v237
                  %v239 = vld [vmem:[%s233 + $0x10] sm:%s226]
                  %240 = vst [vmem:[%s234 + $0x8] sm:%s226] %v239
                  %v241 = vld [vmem:[%s233 + $0x18] sm:%s226]
                  %242 = vst [vmem:[%s234 + $0xc] sm:%s226] %v241
                $region63: #{tpu_custom_call.1} parent=50 // loop_footer
                  %s232 = sadd.s32 1, %s228
                $region64: #{tpu_custom_call.1} parent=50 // loop_footer_branch
                  %227 = sbr.rel target = $region60
                $region65: #{tpu_custom_call.1} parent=50 // loop_exit
                  _
              $region51: #{tpu_custom_call.1} parent=35 // pred_fallthru
                _
            $region36: #{tpu_custom_call.1} parent=31 // pred_fallthru
              _
            // Predicated region
            $region37: #{tpu_custom_call.1} parent=31 // pred_check
              _
            $region38: #{tpu_custom_call.1} parent=31 // pred_check_branch
              %196 = sbr.rel (0) target = $region40
            $region39: #{tpu_custom_call.1} parent=31 // pred_region
              %s198 = ssub.s32 16, 1
              loop: start=0, step=1, limit=1
              $region41: #{tpu_custom_call.1} parent=39 // loop_pre_header
                _
              $region42: #{tpu_custom_call.1} parent=39 // loop_header
                %s200 = sphi 0, %s204
                %p201 = scmp.ge.s32.totalorder %s200, 1
                %s205 = sphi %s190, %s190
                %s206 = sphi %s188, %s188
              $region43: #{tpu_custom_call.1} parent=39 // loop_header_branch
                %203 = sbr.rel (%p201) target = $region47
              $region44: #{tpu_custom_call.1} parent=39 // loop_body
                %v207 = vld [vmem:[%s205] sm:%s198]
                %208 = vst [vmem:[%s206] sm:%s198] %v207
                %v209 = vld [vmem:[%s205 + $0x8] sm:%s198]
                %210 = vst [vmem:[%s206 + $0x4] sm:%s198] %v209
                %v211 = vld [vmem:[%s205 + $0x10] sm:%s198]
                %212 = vst [vmem:[%s206 + $0x8] sm:%s198] %v211
                %v213 = vld [vmem:[%s205 + $0x18] sm:%s198]
                %214 = vst [vmem:[%s206 + $0xc] sm:%s198] %v213
              $region45: #{tpu_custom_call.1} parent=39 // loop_footer
                %s204 = sadd.s32 1, %s200
              $region46: #{tpu_custom_call.1} parent=39 // loop_footer_branch
                %199 = sbr.rel target = $region42
              $region47: #{tpu_custom_call.1} parent=39 // loop_exit
                _
            $region40: #{tpu_custom_call.1} parent=31 // pred_fallthru
              _
          $region32: #{tpu_custom_call.1} parent=27 // pred_fallthru
            _
          %243 = vnop
        $region28: #{tpu_custom_call.1} parent=19 // pred_fallthru
          _
        // Predicated region
        $region66: #{tpu_custom_call.1} parent=19 // pred_check
          %p244 = pneg %p118
        $region67: #{tpu_custom_call.1} parent=19 // pred_check_branch
          %246 = sbr.rel (%p244) target = $region69
        $region68: #{tpu_custom_call.1} parent=19 // pred_region
          %p247 = scmp.lt.s32.totalorder %s21, 1
          %s248 = scalar_select %p247, %s21, 1
          %s249 = scalar_lea.vmem %s3, %s248
        $region69: #{tpu_custom_call.1} parent=19 // pred_fallthru
          _
      $region20: #{tpu_custom_call.1} parent=5 // pred_fallthru
        _
      %p250 = scmp.le.s32.totalorder 1, %s13
      %p251 = scmp.lt.s32.totalorder %s13, 5
      %p252 = pnand %p250, %p251
      %p253 = pneg %p252
      // Predicated region
      $region70: #{tpu_custom_call.1} parent=5 // pred_check
        _
      $region71: #{tpu_custom_call.1} parent=5 // pred_check_branch
        %255 = sbr.rel (%p252) target = $region73
      $region72: #{tpu_custom_call.1} parent=5 // pred_region
        %s256 = ssub.s32 %s13, 1
        %s257 = sand.u32 %s85, 1
        %s258 = sand.u32 %s85, 1
        %s259 = smul.addr %s258, 16
        %s260 = scalar_lea.vmem [#allocation3], %s259
        // Predicated region
        $region74: #{tpu_custom_call.1} parent=72 // pred_check
          %p261 = pneg %p98
        $region75: #{tpu_custom_call.1} parent=72 // pred_check_branch
          %263 = sbr.rel (%p261) target = $region77
        $region76: #{tpu_custom_call.1} parent=72 // pred_region
          _
        $region77: #{tpu_custom_call.1} parent=72 // pred_fallthru
          _
        %p264 = scmp.lt.s32.totalorder %s22, 1
        %s265 = scalar_select %p264, %s22, 1
        %s266 = smul.addr %s265, 54
        %s267 = smul.addr %s266, 4
        %s268 = scalar_lea.vmem %s0, %s267
        %p269 = pneg %p51
        %p270 = pneg %p48
        %p271 = pneg %p72
        %p272 = pneg %p69
        %s273 = sand.u32 %s85, 1
        %s274 = sand.u32 %s85, 1
        %s275 = smul.addr %s274, 16
        %s276 = scalar_lea.vmem [#allocation3], %s275
        %p277 = pneg %p98
        %p278 = pneg %p95
        %p279 = scmp.lt.s32.totalorder %s23, 1
        %s280 = scalar_select %p279, %s23, 1
        %s281 = scalar_lea.vmem %s3, %s280
        %p282 = pneg %p124
        %p283 = pneg %p121
        %p284 = pneg %p152
        %p285 = pneg %p149
        %s286 = sand.u32 %s139, 1
        %s287 = scalar_lea.sflag [#allocation5], %s286
        %s288 = sand.u32 %s139, 1
        %s289 = smul.addr %s288, 256
        %s290 = scalar_lea.vmem [#allocation4], %s289
        %p291 = scmp.lt.s32.totalorder %s22, 1
        %s292 = scalar_select %p291, %s22, 1
        %s293 = smul.addr %s292, 54
        %s294 = smul.addr %s293, 4
        %s295 = scalar_lea.vmem %s0, %s294
        %p296 = scmp.lt.s32.totalorder %s23, 1
        %s297 = scalar_select %p296, %s23, 1
        %s298 = scalar_lea.vmem %s3, %s297
        %p300 = scmp.eq.s32.totalorder %s23, 0
        // Predicated region
        $region78: #{tpu_custom_call.1} parent=72 // pred_check
          %p301 = pneg %p300
        $region79: #{tpu_custom_call.1} parent=72 // pred_check_branch
          %303 = sbr.rel (%p301) target = $region81
        $region80: #{tpu_custom_call.1} parent=72 // pred_region
          %v304 = vld [vmem:[%s295] sm:$0xf]
          %v305 = vld [vmem:[%s295 + $0x4] sm:$0xf]
          %v306 = vld [vmem:[%s295 + $0x8] sm:$0x1]
          %v307 = vld [vmem:[%s295 + $0xc] sm:$0xf]
          %v308 = vld [vmem:[%s295 + $0x10] sm:$0xf]
          %v309 = vld [vmem:[%s295 + $0x14] sm:$0x1]
          %v310 = vld [vmem:[%s295 + $0x18] sm:$0xf]
          %v311 = vld [vmem:[%s295 + $0x1c] sm:$0xf]
          %v312 = vld [vmem:[%s295 + $0x20] sm:$0x1]
          %v313 = vld [vmem:[%s295 + $0x24] sm:$0xf]
          %v314 = vld [vmem:[%s295 + $0x28] sm:$0xf]
          %v315 = vld [vmem:[%s295 + $0x2c] sm:$0x1]
          %v316 = vld [vmem:[%s295 + $0x30] sm:$0xf]
          %v317 = vld [vmem:[%s295 + $0x34] sm:$0xf]
          %v318 = vld [vmem:[%s295 + $0x38] sm:$0x1]
          %v319 = vld [vmem:[%s295 + $0x3c] sm:$0xf]
          %v320 = vld [vmem:[%s295 + $0x40] sm:$0xf]
          %v321 = vld [vmem:[%s295 + $0x44] sm:$0x1]
          %v322 = vld [vmem:[%s295 + $0x48] sm:$0xf]
          %v323 = vld [vmem:[%s295 + $0x4c] sm:$0xf]
          %v324 = vld [vmem:[%s295 + $0x50] sm:$0x1]
          %v325 = vld [vmem:[%s295 + $0x54] sm:$0xf]
          %v326 = vld [vmem:[%s295 + $0x58] sm:$0xf]
          %v327 = vld [vmem:[%s295 + $0x5c] sm:$0x1]
          %v328 = vld [vmem:[%s295 + $0x60] sm:$0xf]
          %v329 = vld [vmem:[%s295 + $0x64] sm:$0xf]
          %v330 = vld [vmem:[%s295 + $0x68] sm:$0x1]
          %v331 = vld [vmem:[%s295 + $0x6c] sm:$0xf]
          %v332 = vld [vmem:[%s295 + $0x70] sm:$0xf]
          %v333 = vld [vmem:[%s295 + $0x74] sm:$0x1]
          %v334 = vld [vmem:[%s295 + $0x78] sm:$0xf]
          %v335 = vld [vmem:[%s295 + $0x7c] sm:$0xf]
          %v336 = vld [vmem:[%s295 + $0x80] sm:$0x1]
          %v337 = vld [vmem:[%s295 + $0x84] sm:$0xf]
          %v338 = vld [vmem:[%s295 + $0x88] sm:$0xf]
          %v339 = vld [vmem:[%s295 + $0x8c] sm:$0x1]
          %v340 = vld [vmem:[%s295 + $0x90] sm:$0xf]
          %v341 = vld [vmem:[%s295 + $0x94] sm:$0xf]
          %v342 = vld [vmem:[%s295 + $0x98] sm:$0x1]
          %v343 = vld [vmem:[%s295 + $0x9c] sm:$0xf]
          %v344 = vld [vmem:[%s295 + $0xa0] sm:$0xf]
          %v345 = vld [vmem:[%s295 + $0xa4] sm:$0x1]
          %v346 = vld [vmem:[%s295 + $0xa8] sm:$0xf]
          %v347 = vld [vmem:[%s295 + $0xac] sm:$0xf]
          %v348 = vld [vmem:[%s295 + $0xb0] sm:$0x1]
          %v349 = vld [vmem:[%s295 + $0xb4] sm:$0xf]
          %v350 = vld [vmem:[%s295 + $0xb8] sm:$0xf]
          %v351 = vld [vmem:[%s295 + $0xbc] sm:$0x1]
          %v352 = vld [vmem:[%s295 + $0xc0] sm:$0xf]
          %v353 = vld [vmem:[%s295 + $0xc4] sm:$0xf]
          %v354 = vld [vmem:[%s295 + $0xc8] sm:$0x1]
          %v355 = vld [vmem:[%s295 + $0xcc] sm:$0xf]
          %v356 = vld [vmem:[%s295 + $0xd0] sm:$0xf]
          %v357 = vld [vmem:[%s295 + $0xd4] sm:$0x1]
          %v358 = vunpack.c.l.bf16 %v304
          %v359 = vunpack.c.l.bf16 %v305
          %v360 = vunpack.c.l.bf16 %v306
          %v361 = vunpack.c.l.bf16 %v307
          %v362 = vunpack.c.l.bf16 %v308
          %v363 = vunpack.c.l.bf16 %v309
          %v364 = vunpack.c.l.bf16 %v310
          %v365 = vunpack.c.l.bf16 %v311
          %v366 = vunpack.c.l.bf16 %v312
          %v367 = vunpack.c.l.bf16 %v313
          %v368 = vunpack.c.l.bf16 %v314
          %v369 = vunpack.c.l.bf16 %v315
          %v370 = vunpack.c.l.bf16 %v316
          %v371 = vunpack.c.l.bf16 %v317
          %v372 = vunpack.c.l.bf16 %v318
          %v373 = vunpack.c.l.bf16 %v319
          %v374 = vunpack.c.l.bf16 %v320
          %v375 = vunpack.c.l.bf16 %v321
          %v376 = vunpack.c.l.bf16 %v322
          %v377 = vunpack.c.l.bf16 %v323
          %v378 = vunpack.c.l.bf16 %v324
          %v379 = vunpack.c.l.bf16 %v325
          %v380 = vunpack.c.l.bf16 %v326
          %v381 = vunpack.c.l.bf16 %v327
          %v382 = vunpack.c.l.bf16 %v328
          %v383 = vunpack.c.l.bf16 %v329
          %v384 = vunpack.c.l.bf16 %v330
          %v385 = vunpack.c.l.bf16 %v331
          %v386 = vunpack.c.l.bf16 %v332
          %v387 = vunpack.c.l.bf16 %v333
          %v388 = vunpack.c.l.bf16 %v334
          %v389 = vunpack.c.l.bf16 %v335
          %v390 = vunpack.c.l.bf16 %v336
          %v391 = vunpack.c.l.bf16 %v337
          %v392 = vunpack.c.l.bf16 %v338
          %v393 = vunpack.c.l.bf16 %v339
          %v394 = vunpack.c.l.bf16 %v340
          %v395 = vunpack.c.l.bf16 %v341
          %v396 = vunpack.c.l.bf16 %v342
          %v397 = vunpack.c.l.bf16 %v343
          %v398 = vunpack.c.l.bf16 %v344
          %v399 = vunpack.c.l.bf16 %v345
          %v400 = vunpack.c.l.bf16 %v346
          %v401 = vunpack.c.l.bf16 %v347
          %v402 = vunpack.c.l.bf16 %v348
          %v403 = vunpack.c.l.bf16 %v349
          %v404 = vunpack.c.l.bf16 %v350
          %v405 = vunpack.c.l.bf16 %v351
          %v406 = vunpack.c.l.bf16 %v352
          %v407 = vunpack.c.l.bf16 %v353
          %v408 = vunpack.c.l.bf16 %v354
          %v409 = vunpack.c.l.bf16 %v355
          %v410 = vunpack.c.l.bf16 %v356
          %v411 = vunpack.c.l.bf16 %v357
          %v412 = vld [vmem:[%s1] sm:$0xff]
          %v413 = vld [vmem:[%s1 + $0x8] sm:$0x1]
          %v414 = vperm.slane %v412, 0
          %v415 = vmul.f32 %v358, %v414
          %v416 = vmul.f32 %v359, %v414
          %v417 = vmul.f32 %v361, %v414
          %v418 = vmul.f32 %v362, %v414
          %v419 = vmul.f32 %v364, %v414
          %v420 = vmul.f32 %v365, %v414
          %v421 = vmul.f32 %v367, %v414
          %v422 = vmul.f32 %v368, %v414
          %v423 = vmul.f32 %v370, %v414
          %v424 = vmul.f32 %v371, %v414
          %v425 = vmul.f32 %v373, %v414
          %v426 = vmul.f32 %v374, %v414
          %v427 = vmul.f32 %v376, %v414
          %v428 = vmul.f32 %v377, %v414
          %v429 = vmul.f32 %v379, %v414
          %v430 = vmul.f32 %v380, %v414
          %v431 = vmul.f32 %v382, %v414
          %v432 = vmul.f32 %v383, %v414
          %v433 = vmul.f32 %v385, %v414
          %v434 = vmul.f32 %v386, %v414
          %v435 = vmul.f32 %v388, %v414
          %v436 = vmul.f32 %v389, %v414
          %v437 = vmul.f32 %v391, %v414
          %v438 = vmul.f32 %v392, %v414
          %v439 = vmul.f32 %v394, %v414
          %v440 = vmul.f32 %v395, %v414
          %v441 = vmul.f32 %v397, %v414
          %v442 = vmul.f32 %v398, %v414
          %v443 = vmul.f32 %v400, %v414
          %v444 = vmul.f32 %v401, %v414
          %v445 = vmul.f32 %v403, %v414
          %v446 = vmul.f32 %v404, %v414
          %v447 = vadd.f32 %v415, 0.0
          %v448 = vadd.f32 %v416, 0.0
          %v449 = vadd.f32 %v417, 0.0
          %v450 = vadd.f32 %v418, 0.0
          %v451 = vadd.f32 %v419, 0.0
          %v452 = vadd.f32 %v420, 0.0
          %v453 = vadd.f32 %v421, 0.0
          %v454 = vadd.f32 %v422, 0.0
          %v455 = vadd.f32 %v423, 0.0
          %v456 = vadd.f32 %v424, 0.0
          %v457 = vadd.f32 %v425, 0.0
          %v458 = vadd.f32 %v426, 0.0
          %v459 = vadd.f32 %v427, 0.0
          %v460 = vadd.f32 %v428, 0.0
          %v461 = vadd.f32 %v429, 0.0
          %v462 = vadd.f32 %v430, 0.0
          %v463 = vadd.f32 %v431, 0.0
          %v464 = vadd.f32 %v432, 0.0
          %v465 = vadd.f32 %v433, 0.0
          %v466 = vadd.f32 %v434, 0.0
          %v467 = vadd.f32 %v435, 0.0
          %v468 = vadd.f32 %v436, 0.0
          %v469 = vadd.f32 %v437, 0.0
          %v470 = vadd.f32 %v438, 0.0
          %v471 = vadd.f32 %v439, 0.0
          %v472 = vadd.f32 %v440, 0.0
          %v473 = vadd.f32 %v441, 0.0
          %v474 = vadd.f32 %v442, 0.0
          %v475 = vadd.f32 %v443, 0.0
          %v476 = vadd.f32 %v444, 0.0
          %v477 = vadd.f32 %v445, 0.0
          %v478 = vadd.f32 %v446, 0.0
          %v479 = vperm.slane %v412, 3
          %v480 = vmul.f32 %v361, %v479
          %v481 = vmul.f32 %v362, %v479
          %v482 = vmul.f32 %v364, %v479
          %v483 = vmul.f32 %v365, %v479
          %v484 = vmul.f32 %v367, %v479
          %v485 = vmul.f32 %v368, %v479
          %v486 = vmul.f32 %v370, %v479
          %v487 = vmul.f32 %v371, %v479
          %v488 = vmul.f32 %v373, %v479
          %v489 = vmul.f32 %v374, %v479
          %v490 = vmul.f32 %v376, %v479
          %v491 = vmul.f32 %v377, %v479
          %v492 = vmul.f32 %v379, %v479
          %v493 = vmul.f32 %v380, %v479
          %v494 = vmul.f32 %v382, %v479
          %v495 = vmul.f32 %v383, %v479
          %v496 = vmul.f32 %v385, %v479
          %v497 = vmul.f32 %v386, %v479
          %v498 = vmul.f32 %v388, %v479
          %v499 = vmul.f32 %v389, %v479
          %v500 = vmul.f32 %v391, %v479
          %v501 = vmul.f32 %v392, %v479
          %v502 = vmul.f32 %v394, %v479
          %v503 = vmul.f32 %v395, %v479
          %v504 = vmul.f32 %v397, %v479
          %v505 = vmul.f32 %v398, %v479
          %v506 = vmul.f32 %v400, %v479
          %v507 = vmul.f32 %v401, %v479
          %v508 = vmul.f32 %v403, %v479
          %v509 = vmul.f32 %v404, %v479
          %v510 = vmul.f32 %v406, %v479
          %v511 = vmul.f32 %v407, %v479
          %v512 = vadd.f32 %v447, %v480
          %v513 = vadd.f32 %v448, %v481
          %v514 = vadd.f32 %v449, %v482
          %v515 = vadd.f32 %v450, %v483
          %v516 = vadd.f32 %v451, %v484
          %v517 = vadd.f32 %v452, %v485
          %v518 = vadd.f32 %v453, %v486
          %v519 = vadd.f32 %v454, %v487
          %v520 = vadd.f32 %v455, %v488
          %v521 = vadd.f32 %v456, %v489
          %v522 = vadd.f32 %v457, %v490
          %v523 = vadd.f32 %v458, %v491
          %v524 = vadd.f32 %v459, %v492
          %v525 = vadd.f32 %v460, %v493
          %v526 = vadd.f32 %v461, %v494
          %v527 = vadd.f32 %v462, %v495
          %v528 = vadd.f32 %v463, %v496
          %v529 = vadd.f32 %v464, %v497
          %v530 = vadd.f32 %v465, %v498
          %v531 = vadd.f32 %v466, %v499
          %v532 = vadd.f32 %v467, %v500
          %v533 = vadd.f32 %v468, %v501
          %v534 = vadd.f32 %v469, %v502
          %v535 = vadd.f32 %v470, %v503
          %v536 = vadd.f32 %v471, %v504
          %v537 = vadd.f32 %v472, %v505
          %v538 = vadd.f32 %v473, %v506
          %v539 = vadd.f32 %v474, %v507
          %v540 = vadd.f32 %v475, %v508
          %v541 = vadd.f32 %v476, %v509
          %v542 = vadd.f32 %v477, %v510
          %v543 = vadd.f32 %v478, %v511
          %v544 = vperm.slane %v412, 6
          %v545 = vmul.f32 %v364, %v544
          %v546 = vmul.f32 %v365, %v544
          %v547 = vmul.f32 %v367, %v544
          %v548 = vmul.f32 %v368, %v544
          %v549 = vmul.f32 %v370, %v544
          %v550 = vmul.f32 %v371, %v544
          %v551 = vmul.f32 %v373, %v544
          %v552 = vmul.f32 %v374, %v544
          %v553 = vmul.f32 %v376, %v544
          %v554 = vmul.f32 %v377, %v544
          %v555 = vmul.f32 %v379, %v544
          %v556 = vmul.f32 %v380, %v544
          %v557 = vmul.f32 %v382, %v544
          %v558 = vmul.f32 %v383, %v544
          %v559 = vmul.f32 %v385, %v544
          %v560 = vmul.f32 %v386, %v544
          %v561 = vmul.f32 %v388, %v544
          %v562 = vmul.f32 %v389, %v544
          %v563 = vmul.f32 %v391, %v544
          %v564 = vmul.f32 %v392, %v544
          %v565 = vmul.f32 %v394, %v544
          %v566 = vmul.f32 %v395, %v544
          %v567 = vmul.f32 %v397, %v544
          %v568 = vmul.f32 %v398, %v544
          %v569 = vmul.f32 %v400, %v544
          %v570 = vmul.f32 %v401, %v544
          %v571 = vmul.f32 %v403, %v544
          %v572 = vmul.f32 %v404, %v544
          %v573 = vmul.f32 %v406, %v544
          %v574 = vmul.f32 %v407, %v544
          %v575 = vmul.f32 %v409, %v544
          %v576 = vmul.f32 %v410, %v544
          %v577 = vadd.f32 %v512, %v545
          %v578 = vadd.f32 %v513, %v546
          %v579 = vadd.f32 %v514, %v547
          %v580 = vadd.f32 %v515, %v548
          %v581 = vadd.f32 %v516, %v549
          %v582 = vadd.f32 %v517, %v550
          %v583 = vadd.f32 %v518, %v551
          %v584 = vadd.f32 %v519, %v552
          %v585 = vadd.f32 %v520, %v553
          %v586 = vadd.f32 %v521, %v554
          %v587 = vadd.f32 %v522, %v555
          %v588 = vadd.f32 %v523, %v556
          %v589 = vadd.f32 %v524, %v557
          %v590 = vadd.f32 %v525, %v558
          %v591 = vadd.f32 %v526, %v559
          %v592 = vadd.f32 %v527, %v560
          %v593 = vadd.f32 %v528, %v561
          %v594 = vadd.f32 %v529, %v562
          %v595 = vadd.f32 %v530, %v563
          %v596 = vadd.f32 %v531, %v564
          %v597 = vadd.f32 %v532, %v565
          %v598 = vadd.f32 %v533, %v566
          %v599 = vadd.f32 %v534, %v567
          %v600 = vadd.f32 %v535, %v568
          %v601 = vadd.f32 %v536, %v569
          %v602 = vadd.f32 %v537, %v570
          %v603 = vadd.f32 %v538, %v571
          %v604 = vadd.f32 %v539, %v572
          %v605 = vadd.f32 %v540, %v573
          %v606 = vadd.f32 %v541, %v574
          %v607 = vadd.f32 %v542, %v575
          %v608 = vadd.f32 %v543, %v576
          %v609 = vperm.slane %v412, 1
          %v610 = vmul.f32 %v358, %v609
          %v611 = vmul.f32 %v359, %v609
          %v612 = vmul.f32 %v360, %v609
          %v613 = vmul.f32 %v361, %v609
          %v614 = vmul.f32 %v362, %v609
          %v615 = vmul.f32 %v363, %v609
          %v616 = vmul.f32 %v364, %v609
          %v617 = vmul.f32 %v365, %v609
          %v618 = vmul.f32 %v366, %v609
          %v619 = vmul.f32 %v367, %v609
          %v620 = vmul.f32 %v368, %v609
          %v621 = vmul.f32 %v369, %v609
          %v622 = vmul.f32 %v370, %v609
          %v623 = vmul.f32 %v371, %v609
          %v624 = vmul.f32 %v372, %v609
          %v625 = vmul.f32 %v373, %v609
          %v626 = vmul.f32 %v374, %v609
          %v627 = vmul.f32 %v375, %v609
          %v628 = vmul.f32 %v376, %v609
          %v629 = vmul.f32 %v377, %v609
          %v630 = vmul.f32 %v378, %v609
          %v631 = vmul.f32 %v379, %v609
          %v632 = vmul.f32 %v380, %v609
          %v633 = vmul.f32 %v381, %v609
          %v634 = vmul.f32 %v382, %v609
          %v635 = vmul.f32 %v383, %v609
          %v636 = vmul.f32 %v384, %v609
          %v637 = vmul.f32 %v385, %v609
          %v638 = vmul.f32 %v386, %v609
          %v639 = vmul.f32 %v387, %v609
          %v640 = vmul.f32 %v388, %v609
          %v641 = vmul.f32 %v389, %v609
          %v642 = vmul.f32 %v390, %v609
          %v643 = vmul.f32 %v391, %v609
          %v644 = vmul.f32 %v392, %v609
          %v645 = vmul.f32 %v393, %v609
          %v646 = vmul.f32 %v394, %v609
          %v647 = vmul.f32 %v395, %v609
          %v648 = vmul.f32 %v396, %v609
          %v649 = vmul.f32 %v397, %v609
          %v650 = vmul.f32 %v398, %v609
          %v651 = vmul.f32 %v399, %v609
          %v652 = vmul.f32 %v400, %v609
          %v653 = vmul.f32 %v401, %v609
          %v654 = vmul.f32 %v402, %v609
          %v655 = vmul.f32 %v403, %v609
          %v656 = vmul.f32 %v404, %v609
          %v657 = vmul.f32 %v405, %v609
          %vm706 = vcmask 1046528
          %v707 = vrot.slane %v610, 1
          %v708 = vrot.slane %v611, 1
          %v709 = vsel %vm706, %v707, %v708
          %v710 = vrot.slane %v612, 1
          %v711 = vsel %vm706, %v708, %v710
          %v712 = vrot.slane %v613, 1
          %v713 = vrot.slane %v614, 1
          %v714 = vsel %vm706, %v712, %v713
          %v715 = vrot.slane %v615, 1
          %v716 = vsel %vm706, %v713, %v715
          %v717 = vrot.slane %v616, 1
          %v718 = vrot.slane %v617, 1
          %v719 = vsel %vm706, %v717, %v718
          %v720 = vrot.slane %v618, 1
          %v721 = vsel %vm706, %v718, %v720
          %v722 = vrot.slane %v619, 1
          %v723 = vrot.slane %v620, 1
          %v724 = vsel %vm706, %v722, %v723
          %v725 = vrot.slane %v621, 1
          %v726 = vsel %vm706, %v723, %v725
          %v727 = vrot.slane %v622, 1
          %v728 = vrot.slane %v623, 1
          %v729 = vsel %vm706, %v727, %v728
          %v730 = vrot.slane %v624, 1
          %v731 = vsel %vm706, %v728, %v730
          %v732 = vrot.slane %v625, 1
          %v733 = vrot.slane %v626, 1
          %v734 = vsel %vm706, %v732, %v733
          %v735 = vrot.slane %v627, 1
          %v736 = vsel %vm706, %v733, %v735
          %v737 = vrot.slane %v628, 1
          %v738 = vrot.slane %v629, 1
          %v739 = vsel %vm706, %v737, %v738
          %v740 = vrot.slane %v630, 1
          %v741 = vsel %vm706, %v738, %v740
          %v742 = vrot.slane %v631, 1
          %v743 = vrot.slane %v632, 1
          %v744 = vsel %vm706, %v742, %v743
          %v745 = vrot.slane %v633, 1
          %v746 = vsel %vm706, %v743, %v745
          %v747 = vrot.slane %v634, 1
          %v748 = vrot.slane %v635, 1
          %v749 = vsel %vm706, %v747, %v748
          %v750 = vrot.slane %v636, 1
          %v751 = vsel %vm706, %v748, %v750
          %v752 = vrot.slane %v637, 1
          %v753 = vrot.slane %v638, 1
          %v754 = vsel %vm706, %v752, %v753
          %v755 = vrot.slane %v639, 1
          %v756 = vsel %vm706, %v753, %v755
          %v757 = vrot.slane %v640, 1
          %v758 = vrot.slane %v641, 1
          %v759 = vsel %vm706, %v757, %v758
          %v760 = vrot.slane %v642, 1
          %v761 = vsel %vm706, %v758, %v760
          %v762 = vrot.slane %v643, 1
          %v763 = vrot.slane %v644, 1
          %v764 = vsel %vm706, %v762, %v763
          %v765 = vrot.slane %v645, 1
          %v766 = vsel %vm706, %v763, %v765
          %v767 = vrot.slane %v646, 1
          %v768 = vrot.slane %v647, 1
          %v769 = vsel %vm706, %v767, %v768
          %v770 = vrot.slane %v648, 1
          %v771 = vsel %vm706, %v768, %v770
          %v772 = vrot.slane %v649, 1
          %v773 = vrot.slane %v650, 1
          %v774 = vsel %vm706, %v772, %v773
          %v775 = vrot.slane %v651, 1
          %v776 = vsel %vm706, %v773, %v775
          %v777 = vrot.slane %v652, 1
          %v778 = vrot.slane %v653, 1
          %v779 = vsel %vm706, %v777, %v778
          %v780 = vrot.slane %v654, 1
          %v781 = vsel %vm706, %v778, %v780
          %v782 = vrot.slane %v655, 1
          %v783 = vrot.slane %v656, 1
          %v784 = vsel %vm706, %v782, %v783
          %v785 = vrot.slane %v657, 1
          %v786 = vsel %vm706, %v783, %v785
          %v819 = vadd.f32 %v577, %v709
          %v820 = vadd.f32 %v578, %v711
          %v821 = vadd.f32 %v579, %v714
          %v822 = vadd.f32 %v580, %v716
          %v823 = vadd.f32 %v581, %v719
          %v824 = vadd.f32 %v582, %v721
          %v825 = vadd.f32 %v583, %v724
          %v826 = vadd.f32 %v584, %v726
          %v827 = vadd.f32 %v585, %v729
          %v828 = vadd.f32 %v586, %v731
          %v829 = vadd.f32 %v587, %v734
          %v830 = vadd.f32 %v588, %v736
          %v831 = vadd.f32 %v589, %v739
          %v832 = vadd.f32 %v590, %v741
          %v833 = vadd.f32 %v591, %v744
          %v834 = vadd.f32 %v592, %v746
          %v835 = vadd.f32 %v593, %v749
          %v836 = vadd.f32 %v594, %v751
          %v837 = vadd.f32 %v595, %v754
          %v838 = vadd.f32 %v596, %v756
          %v839 = vadd.f32 %v597, %v759
          %v840 = vadd.f32 %v598, %v761
          %v841 = vadd.f32 %v599, %v764
          %v842 = vadd.f32 %v600, %v766
          %v843 = vadd.f32 %v601, %v769
          %v844 = vadd.f32 %v602, %v771
          %v845 = vadd.f32 %v603, %v774
          %v846 = vadd.f32 %v604, %v776
          %v847 = vadd.f32 %v605, %v779
          %v848 = vadd.f32 %v606, %v781
          %v849 = vadd.f32 %v607, %v784
          %v850 = vadd.f32 %v608, %v786
          %v851 = vperm.slane %v412, 4
          %v852 = vmul.f32 %v361, %v851
          %v853 = vmul.f32 %v362, %v851
          %v854 = vmul.f32 %v363, %v851
          %v855 = vmul.f32 %v364, %v851
          %v856 = vmul.f32 %v365, %v851
          %v857 = vmul.f32 %v366, %v851
          %v858 = vmul.f32 %v367, %v851
          %v859 = vmul.f32 %v368, %v851
          %v860 = vmul.f32 %v369, %v851
          %v861 = vmul.f32 %v370, %v851
          %v862 = vmul.f32 %v371, %v851
          %v863 = vmul.f32 %v372, %v851
          %v864 = vmul.f32 %v373, %v851
          %v865 = vmul.f32 %v374, %v851
          %v866 = vmul.f32 %v375, %v851
          %v867 = vmul.f32 %v376, %v851
          %v868 = vmul.f32 %v377, %v851
          %v869 = vmul.f32 %v378, %v851
          %v870 = vmul.f32 %v379, %v851
          %v871 = vmul.f32 %v380, %v851
          %v872 = vmul.f32 %v381, %v851
          %v873 = vmul.f32 %v382, %v851
          %v874 = vmul.f32 %v383, %v851
          %v875 = vmul.f32 %v384, %v851
          %v876 = vmul.f32 %v385, %v851
          %v877 = vmul.f32 %v386, %v851
          %v878 = vmul.f32 %v387, %v851
          %v879 = vmul.f32 %v388, %v851
          %v880 = vmul.f32 %v389, %v851
          %v881 = vmul.f32 %v390, %v851
          %v882 = vmul.f32 %v391, %v851
          %v883 = vmul.f32 %v392, %v851
          %v884 = vmul.f32 %v393, %v851
          %v885 = vmul.f32 %v394, %v851
          %v886 = vmul.f32 %v395, %v851
          %v887 = vmul.f32 %v396, %v851
          %v888 = vmul.f32 %v397, %v851
          %v889 = vmul.f32 %v398, %v851
          %v890 = vmul.f32 %v399, %v851
          %v891 = vmul.f32 %v400, %v851
          %v892 = vmul.f32 %v401, %v851
          %v893 = vmul.f32 %v402, %v851
          %v894 = vmul.f32 %v403, %v851
          %v895 = vmul.f32 %v404, %v851
          %v896 = vmul.f32 %v405, %v851
          %v897 = vmul.f32 %v406, %v851
          %v898 = vmul.f32 %v407, %v851
          %v899 = vmul.f32 %v408, %v851
          %v948 = vrot.slane %v852, 1
          %v949 = vrot.slane %v853, 1
          %v950 = vsel %vm706, %v948, %v949
          %v951 = vrot.slane %v854, 1
          %v952 = vsel %vm706, %v949, %v951
          %v953 = vrot.slane %v855, 1
          %v954 = vrot.slane %v856, 1
          %v955 = vsel %vm706, %v953, %v954
          %v956 = vrot.slane %v857, 1
          %v957 = vsel %vm706, %v954, %v956
          %v958 = vrot.slane %v858, 1
          %v959 = vrot.slane %v859, 1
          %v960 = vsel %vm706, %v958, %v959
          %v961 = vrot.slane %v860, 1
          %v962 = vsel %vm706, %v959, %v961
          %v963 = vrot.slane %v861, 1
          %v964 = vrot.slane %v862, 1
          %v965 = vsel %vm706, %v963, %v964
          %v966 = vrot.slane %v863, 1
          %v967 = vsel %vm706, %v964, %v966
          %v968 = vrot.slane %v864, 1
          %v969 = vrot.slane %v865, 1
          %v970 = vsel %vm706, %v968, %v969
          %v971 = vrot.slane %v866, 1
          %v972 = vsel %vm706, %v969, %v971
          %v973 = vrot.slane %v867, 1
          %v974 = vrot.slane %v868, 1
          %v975 = vsel %vm706, %v973, %v974
          %v976 = vrot.slane %v869, 1
          %v977 = vsel %vm706, %v974, %v976
          %v978 = vrot.slane %v870, 1
          %v979 = vrot.slane %v871, 1
          %v980 = vsel %vm706, %v978, %v979
          %v981 = vrot.slane %v872, 1
          %v982 = vsel %vm706, %v979, %v981
          %v983 = vrot.slane %v873, 1
          %v984 = vrot.slane %v874, 1
          %v985 = vsel %vm706, %v983, %v984
          %v986 = vrot.slane %v875, 1
          %v987 = vsel %vm706, %v984, %v986
          %v988 = vrot.slane %v876, 1
          %v989 = vrot.slane %v877, 1
          %v990 = vsel %vm706, %v988, %v989
          %v991 = vrot.slane %v878, 1
          %v992 = vsel %vm706, %v989, %v991
          %v993 = vrot.slane %v879, 1
          %v994 = vrot.slane %v880, 1
          %v995 = vsel %vm706, %v993, %v994
          %v996 = vrot.slane %v881, 1
          %v997 = vsel %vm706, %v994, %v996
          %v998 = vrot.slane %v882, 1
          %v999 = vrot.slane %v883, 1
          %v1000 = vsel %vm706, %v998, %v999
          %v1001 = vrot.slane %v884, 1
          %v1002 = vsel %vm706, %v999, %v1001
          %v1003 = vrot.slane %v885, 1
          %v1004 = vrot.slane %v886, 1
          %v1005 = vsel %vm706, %v1003, %v1004
          %v1006 = vrot.slane %v887, 1
          %v1007 = vsel %vm706, %v1004, %v1006
          %v1008 = vrot.slane %v888, 1
          %v1009 = vrot.slane %v889, 1
          %v1010 = vsel %vm706, %v1008, %v1009
          %v1011 = vrot.slane %v890, 1
          %v1012 = vsel %vm706, %v1009, %v1011
          %v1013 = vrot.slane %v891, 1
          %v1014 = vrot.slane %v892, 1
          %v1015 = vsel %vm706, %v1013, %v1014
          %v1016 = vrot.slane %v893, 1
          %v1017 = vsel %vm706, %v1014, %v1016
          %v1018 = vrot.slane %v894, 1
          %v1019 = vrot.slane %v895, 1
          %v1020 = vsel %vm706, %v1018, %v1019
          %v1021 = vrot.slane %v896, 1
          %v1022 = vsel %vm706, %v1019, %v1021
          %v1023 = vrot.slane %v897, 1
          %v1024 = vrot.slane %v898, 1
          %v1025 = vsel %vm706, %v1023, %v1024
          %v1026 = vrot.slane %v899, 1
          %v1027 = vsel %vm706, %v1024, %v1026
          %v1060 = vadd.f32 %v819, %v950
          %v1061 = vadd.f32 %v820, %v952
          %v1062 = vadd.f32 %v821, %v955
          %v1063 = vadd.f32 %v822, %v957
          %v1064 = vadd.f32 %v823, %v960
          %v1065 = vadd.f32 %v824, %v962
          %v1066 = vadd.f32 %v825, %v965
          %v1067 = vadd.f32 %v826, %v967
          %v1068 = vadd.f32 %v827, %v970
          %v1069 = vadd.f32 %v828, %v972
          %v1070 = vadd.f32 %v829, %v975
          %v1071 = vadd.f32 %v830, %v977
          %v1072 = vadd.f32 %v831, %v980
          %v1073 = vadd.f32 %v832, %v982
          %v1074 = vadd.f32 %v833, %v985
          %v1075 = vadd.f32 %v834, %v987
          %v1076 = vadd.f32 %v835, %v990
          %v1077 = vadd.f32 %v836, %v992
          %v1078 = vadd.f32 %v837, %v995
          %v1079 = vadd.f32 %v838, %v997
          %v1080 = vadd.f32 %v839, %v1000
          %v1081 = vadd.f32 %v840, %v1002
          %v1082 = vadd.f32 %v841, %v1005
          %v1083 = vadd.f32 %v842, %v1007
          %v1084 = vadd.f32 %v843, %v1010
          %v1085 = vadd.f32 %v844, %v1012
          %v1086 = vadd.f32 %v845, %v1015
          %v1087 = vadd.f32 %v846, %v1017
          %v1088 = vadd.f32 %v847, %v1020
          %v1089 = vadd.f32 %v848, %v1022
          %v1090 = vadd.f32 %v849, %v1025
          %v1091 = vadd.f32 %v850, %v1027
          %v1092 = vperm.slane %v412, 7
          %v1093 = vmul.f32 %v364, %v1092
          %v1094 = vmul.f32 %v365, %v1092
          %v1095 = vmul.f32 %v366, %v1092
          %v1096 = vmul.f32 %v367, %v1092
          %v1097 = vmul.f32 %v368, %v1092
          %v1098 = vmul.f32 %v369, %v1092
          %v1099 = vmul.f32 %v370, %v1092
          %v1100 = vmul.f32 %v371, %v1092
          %v1101 = vmul.f32 %v372, %v1092
          %v1102 = vmul.f32 %v373, %v1092
          %v1103 = vmul.f32 %v374, %v1092
          %v1104 = vmul.f32 %v375, %v1092
          %v1105 = vmul.f32 %v376, %v1092
          %v1106 = vmul.f32 %v377, %v1092
          %v1107 = vmul.f32 %v378, %v1092
          %v1108 = vmul.f32 %v379, %v1092
          %v1109 = vmul.f32 %v380, %v1092
          %v1110 = vmul.f32 %v381, %v1092
          %v1111 = vmul.f32 %v382, %v1092
          %v1112 = vmul.f32 %v383, %v1092
          %v1113 = vmul.f32 %v384, %v1092
          %v1114 = vmul.f32 %v385, %v1092
          %v1115 = vmul.f32 %v386, %v1092
          %v1116 = vmul.f32 %v387, %v1092
          %v1117 = vmul.f32 %v388, %v1092
          %v1118 = vmul.f32 %v389, %v1092
          %v1119 = vmul.f32 %v390, %v1092
          %v1120 = vmul.f32 %v391, %v1092
          %v1121 = vmul.f32 %v392, %v1092
          %v1122 = vmul.f32 %v393, %v1092
          %v1123 = vmul.f32 %v394, %v1092
          %v1124 = vmul.f32 %v395, %v1092
          %v1125 = vmul.f32 %v396, %v1092
          %v1126 = vmul.f32 %v397, %v1092
          %v1127 = vmul.f32 %v398, %v1092
          %v1128 = vmul.f32 %v399, %v1092
          %v1129 = vmul.f32 %v400, %v1092
          %v1130 = vmul.f32 %v401, %v1092
          %v1131 = vmul.f32 %v402, %v1092
          %v1132 = vmul.f32 %v403, %v1092
          %v1133 = vmul.f32 %v404, %v1092
          %v1134 = vmul.f32 %v405, %v1092
          %v1135 = vmul.f32 %v406, %v1092
          %v1136 = vmul.f32 %v407, %v1092
          %v1137 = vmul.f32 %v408, %v1092
          %v1138 = vmul.f32 %v409, %v1092
          %v1139 = vmul.f32 %v410, %v1092
          %v1140 = vmul.f32 %v411, %v1092
          %v1189 = vrot.slane %v1093, 1
          %v1190 = vrot.slane %v1094, 1
          %v1191 = vsel %vm706, %v1189, %v1190
          %v1192 = vrot.slane %v1095, 1
          %v1193 = vsel %vm706, %v1190, %v1192
          %v1194 = vrot.slane %v1096, 1
          %v1195 = vrot.slane %v1097, 1
          %v1196 = vsel %vm706, %v1194, %v1195
          %v1197 = vrot.slane %v1098, 1
          %v1198 = vsel %vm706, %v1195, %v1197
          %v1199 = vrot.slane %v1099, 1
          %v1200 = vrot.slane %v1100, 1
          %v1201 = vsel %vm706, %v1199, %v1200
          %v1202 = vrot.slane %v1101, 1
          %v1203 = vsel %vm706, %v1200, %v1202
          %v1204 = vrot.slane %v1102, 1
          %v1205 = vrot.slane %v1103, 1
          %v1206 = vsel %vm706, %v1204, %v1205
          %v1207 = vrot.slane %v1104, 1
          %v1208 = vsel %vm706, %v1205, %v1207
          %v1209 = vrot.slane %v1105, 1
          %v1210 = vrot.slane %v1106, 1
          %v1211 = vsel %vm706, %v1209, %v1210
          %v1212 = vrot.slane %v1107, 1
          %v1213 = vsel %vm706, %v1210, %v1212
          %v1214 = vrot.slane %v1108, 1
          %v1215 = vrot.slane %v1109, 1
          %v1216 = vsel %vm706, %v1214, %v1215
          %v1217 = vrot.slane %v1110, 1
          %v1218 = vsel %vm706, %v1215, %v1217
          %v1219 = vrot.slane %v1111, 1
          %v1220 = vrot.slane %v1112, 1
          %v1221 = vsel %vm706, %v1219, %v1220
          %v1222 = vrot.slane %v1113, 1
          %v1223 = vsel %vm706, %v1220, %v1222
          %v1224 = vrot.slane %v1114, 1
          %v1225 = vrot.slane %v1115, 1
          %v1226 = vsel %vm706, %v1224, %v1225
          %v1227 = vrot.slane %v1116, 1
          %v1228 = vsel %vm706, %v1225, %v1227
          %v1229 = vrot.slane %v1117, 1
          %v1230 = vrot.slane %v1118, 1
          %v1231 = vsel %vm706, %v1229, %v1230
          %v1232 = vrot.slane %v1119, 1
          %v1233 = vsel %vm706, %v1230, %v1232
          %v1234 = vrot.slane %v1120, 1
          %v1235 = vrot.slane %v1121, 1
          %v1236 = vsel %vm706, %v1234, %v1235
          %v1237 = vrot.slane %v1122, 1
          %v1238 = vsel %vm706, %v1235, %v1237
          %v1239 = vrot.slane %v1123, 1
          %v1240 = vrot.slane %v1124, 1
          %v1241 = vsel %vm706, %v1239, %v1240
          %v1242 = vrot.slane %v1125, 1
          %v1243 = vsel %vm706, %v1240, %v1242
          %v1244 = vrot.slane %v1126, 1
          %v1245 = vrot.slane %v1127, 1
          %v1246 = vsel %vm706, %v1244, %v1245
          %v1247 = vrot.slane %v1128, 1
          %v1248 = vsel %vm706, %v1245, %v1247
          %v1249 = vrot.slane %v1129, 1
          %v1250 = vrot.slane %v1130, 1
          %v1251 = vsel %vm706, %v1249, %v1250
          %v1252 = vrot.slane %v1131, 1
          %v1253 = vsel %vm706, %v1250, %v1252
          %v1254 = vrot.slane %v1132, 1
          %v1255 = vrot.slane %v1133, 1
          %v1256 = vsel %vm706, %v1254, %v1255
          %v1257 = vrot.slane %v1134, 1
          %v1258 = vsel %vm706, %v1255, %v1257
          %v1259 = vrot.slane %v1135, 1
          %v1260 = vrot.slane %v1136, 1
          %v1261 = vsel %vm706, %v1259, %v1260
          %v1262 = vrot.slane %v1137, 1
          %v1263 = vsel %vm706, %v1260, %v1262
          %v1264 = vrot.slane %v1138, 1
          %v1265 = vrot.slane %v1139, 1
          %v1266 = vsel %vm706, %v1264, %v1265
          %v1267 = vrot.slane %v1140, 1
          %v1268 = vsel %vm706, %v1265, %v1267
          %v1301 = vadd.f32 %v1060, %v1191
          %v1302 = vadd.f32 %v1061, %v1193
          %v1303 = vadd.f32 %v1062, %v1196
          %v1304 = vadd.f32 %v1063, %v1198
          %v1305 = vadd.f32 %v1064, %v1201
          %v1306 = vadd.f32 %v1065, %v1203
          %v1307 = vadd.f32 %v1066, %v1206
          %v1308 = vadd.f32 %v1067, %v1208
          %v1309 = vadd.f32 %v1068, %v1211
          %v1310 = vadd.f32 %v1069, %v1213
          %v1311 = vadd.f32 %v1070, %v1216
          %v1312 = vadd.f32 %v1071, %v1218
          %v1313 = vadd.f32 %v1072, %v1221
          %v1314 = vadd.f32 %v1073, %v1223
          %v1315 = vadd.f32 %v1074, %v1226
          %v1316 = vadd.f32 %v1075, %v1228
          %v1317 = vadd.f32 %v1076, %v1231
          %v1318 = vadd.f32 %v1077, %v1233
          %v1319 = vadd.f32 %v1078, %v1236
          %v1320 = vadd.f32 %v1079, %v1238
          %v1321 = vadd.f32 %v1080, %v1241
          %v1322 = vadd.f32 %v1081, %v1243
          %v1323 = vadd.f32 %v1082, %v1246
          %v1324 = vadd.f32 %v1083, %v1248
          %v1325 = vadd.f32 %v1084, %v1251
          %v1326 = vadd.f32 %v1085, %v1253
          %v1327 = vadd.f32 %v1086, %v1256
          %v1328 = vadd.f32 %v1087, %v1258
          %v1329 = vadd.f32 %v1088, %v1261
          %v1330 = vadd.f32 %v1089, %v1263
          %v1331 = vadd.f32 %v1090, %v1266
          %v1332 = vadd.f32 %v1091, %v1268
          %v1333 = vperm.slane %v412, 2
          %v1334 = vmul.f32 %v358, %v1333
          %v1335 = vmul.f32 %v359, %v1333
          %v1336 = vmul.f32 %v360, %v1333
          %v1337 = vmul.f32 %v361, %v1333
          %v1338 = vmul.f32 %v362, %v1333
          %v1339 = vmul.f32 %v363, %v1333
          %v1340 = vmul.f32 %v364, %v1333
          %v1341 = vmul.f32 %v365, %v1333
          %v1342 = vmul.f32 %v366, %v1333
          %v1343 = vmul.f32 %v367, %v1333
          %v1344 = vmul.f32 %v368, %v1333
          %v1345 = vmul.f32 %v369, %v1333
          %v1346 = vmul.f32 %v370, %v1333
          %v1347 = vmul.f32 %v371, %v1333
          %v1348 = vmul.f32 %v372, %v1333
          %v1349 = vmul.f32 %v373, %v1333
          %v1350 = vmul.f32 %v374, %v1333
          %v1351 = vmul.f32 %v375, %v1333
          %v1352 = vmul.f32 %v376, %v1333
          %v1353 = vmul.f32 %v377, %v1333
          %v1354 = vmul.f32 %v378, %v1333
          %v1355 = vmul.f32 %v379, %v1333
          %v1356 = vmul.f32 %v380, %v1333
          %v1357 = vmul.f32 %v381, %v1333
          %v1358 = vmul.f32 %v382, %v1333
          %v1359 = vmul.f32 %v383, %v1333
          %v1360 = vmul.f32 %v384, %v1333
          %v1361 = vmul.f32 %v385, %v1333
          %v1362 = vmul.f32 %v386, %v1333
          %v1363 = vmul.f32 %v387, %v1333
          %v1364 = vmul.f32 %v388, %v1333
          %v1365 = vmul.f32 %v389, %v1333
          %v1366 = vmul.f32 %v390, %v1333
          %v1367 = vmul.f32 %v391, %v1333
          %v1368 = vmul.f32 %v392, %v1333
          %v1369 = vmul.f32 %v393, %v1333
          %v1370 = vmul.f32 %v394, %v1333
          %v1371 = vmul.f32 %v395, %v1333
          %v1372 = vmul.f32 %v396, %v1333
          %v1373 = vmul.f32 %v397, %v1333
          %v1374 = vmul.f32 %v398, %v1333
          %v1375 = vmul.f32 %v399, %v1333
          %v1376 = vmul.f32 %v400, %v1333
          %v1377 = vmul.f32 %v401, %v1333
          %v1378 = vmul.f32 %v402, %v1333
          %v1379 = vmul.f32 %v403, %v1333
          %v1380 = vmul.f32 %v404, %v1333
          %v1381 = vmul.f32 %v405, %v1333
          %vm1430 = vcmask 1045504
          %v1431 = vrot.slane %v1334, 2
          %v1432 = vrot.slane %v1335, 2
          %v1433 = vsel %vm1430, %v1431, %v1432
          %v1434 = vrot.slane %v1336, 2
          %v1435 = vsel %vm1430, %v1432, %v1434
          %v1436 = vrot.slane %v1337, 2
          %v1437 = vrot.slane %v1338, 2
          %v1438 = vsel %vm1430, %v1436, %v1437
          %v1439 = vrot.slane %v1339, 2
          %v1440 = vsel %vm1430, %v1437, %v1439
          %v1441 = vrot.slane %v1340, 2
          %v1442 = vrot.slane %v1341, 2
          %v1443 = vsel %vm1430, %v1441, %v1442
          %v1444 = vrot.slane %v1342, 2
          %v1445 = vsel %vm1430, %v1442, %v1444
          %v1446 = vrot.slane %v1343, 2
          %v1447 = vrot.slane %v1344, 2
          %v1448 = vsel %vm1430, %v1446, %v1447
          %v1449 = vrot.slane %v1345, 2
          %v1450 = vsel %vm1430, %v1447, %v1449
          %v1451 = vrot.slane %v1346, 2
          %v1452 = vrot.slane %v1347, 2
          %v1453 = vsel %vm1430, %v1451, %v1452
          %v1454 = vrot.slane %v1348, 2
          %v1455 = vsel %vm1430, %v1452, %v1454
          %v1456 = vrot.slane %v1349, 2
          %v1457 = vrot.slane %v1350, 2
          %v1458 = vsel %vm1430, %v1456, %v1457
          %v1459 = vrot.slane %v1351, 2
          %v1460 = vsel %vm1430, %v1457, %v1459
          %v1461 = vrot.slane %v1352, 2
          %v1462 = vrot.slane %v1353, 2
          %v1463 = vsel %vm1430, %v1461, %v1462
          %v1464 = vrot.slane %v1354, 2
          %v1465 = vsel %vm1430, %v1462, %v1464
          %v1466 = vrot.slane %v1355, 2
          %v1467 = vrot.slane %v1356, 2
          %v1468 = vsel %vm1430, %v1466, %v1467
          %v1469 = vrot.slane %v1357, 2
          %v1470 = vsel %vm1430, %v1467, %v1469
          %v1471 = vrot.slane %v1358, 2
          %v1472 = vrot.slane %v1359, 2
          %v1473 = vsel %vm1430, %v1471, %v1472
          %v1474 = vrot.slane %v1360, 2
          %v1475 = vsel %vm1430, %v1472, %v1474
          %v1476 = vrot.slane %v1361, 2
          %v1477 = vrot.slane %v1362, 2
          %v1478 = vsel %vm1430, %v1476, %v1477
          %v1479 = vrot.slane %v1363, 2
          %v1480 = vsel %vm1430, %v1477, %v1479
          %v1481 = vrot.slane %v1364, 2
          %v1482 = vrot.slane %v1365, 2
          %v1483 = vsel %vm1430, %v1481, %v1482
          %v1484 = vrot.slane %v1366, 2
          %v1485 = vsel %vm1430, %v1482, %v1484
          %v1486 = vrot.slane %v1367, 2
          %v1487 = vrot.slane %v1368, 2
          %v1488 = vsel %vm1430, %v1486, %v1487
          %v1489 = vrot.slane %v1369, 2
          %v1490 = vsel %vm1430, %v1487, %v1489
          %v1491 = vrot.slane %v1370, 2
          %v1492 = vrot.slane %v1371, 2
          %v1493 = vsel %vm1430, %v1491, %v1492
          %v1494 = vrot.slane %v1372, 2
          %v1495 = vsel %vm1430, %v1492, %v1494
          %v1496 = vrot.slane %v1373, 2
          %v1497 = vrot.slane %v1374, 2
          %v1498 = vsel %vm1430, %v1496, %v1497
          %v1499 = vrot.slane %v1375, 2
          %v1500 = vsel %vm1430, %v1497, %v1499
          %v1501 = vrot.slane %v1376, 2
          %v1502 = vrot.slane %v1377, 2
          %v1503 = vsel %vm1430, %v1501, %v1502
          %v1504 = vrot.slane %v1378, 2
          %v1505 = vsel %vm1430, %v1502, %v1504
          %v1506 = vrot.slane %v1379, 2
          %v1507 = vrot.slane %v1380, 2
          %v1508 = vsel %vm1430, %v1506, %v1507
          %v1509 = vrot.slane %v1381, 2
          %v1510 = vsel %vm1430, %v1507, %v1509
          %v1543 = vadd.f32 %v1301, %v1433
          %v1544 = vadd.f32 %v1302, %v1435
          %v1545 = vadd.f32 %v1303, %v1438
          %v1546 = vadd.f32 %v1304, %v1440
          %v1547 = vadd.f32 %v1305, %v1443
          %v1548 = vadd.f32 %v1306, %v1445
          %v1549 = vadd.f32 %v1307, %v1448
          %v1550 = vadd.f32 %v1308, %v1450
          %v1551 = vadd.f32 %v1309, %v1453
          %v1552 = vadd.f32 %v1310, %v1455
          %v1553 = vadd.f32 %v1311, %v1458
          %v1554 = vadd.f32 %v1312, %v1460
          %v1555 = vadd.f32 %v1313, %v1463
          %v1556 = vadd.f32 %v1314, %v1465
          %v1557 = vadd.f32 %v1315, %v1468
          %v1558 = vadd.f32 %v1316, %v1470
          %v1559 = vadd.f32 %v1317, %v1473
          %v1560 = vadd.f32 %v1318, %v1475
          %v1561 = vadd.f32 %v1319, %v1478
          %v1562 = vadd.f32 %v1320, %v1480
          %v1563 = vadd.f32 %v1321, %v1483
          %v1564 = vadd.f32 %v1322, %v1485
          %v1565 = vadd.f32 %v1323, %v1488
          %v1566 = vadd.f32 %v1324, %v1490
          %v1567 = vadd.f32 %v1325, %v1493
          %v1568 = vadd.f32 %v1326, %v1495
          %v1569 = vadd.f32 %v1327, %v1498
          %v1570 = vadd.f32 %v1328, %v1500
          %v1571 = vadd.f32 %v1329, %v1503
          %v1572 = vadd.f32 %v1330, %v1505
          %v1573 = vadd.f32 %v1331, %v1508
          %v1574 = vadd.f32 %v1332, %v1510
          %v1575 = vperm.slane %v412, 5
          %v1576 = vmul.f32 %v361, %v1575
          %v1577 = vmul.f32 %v362, %v1575
          %v1578 = vmul.f32 %v363, %v1575
          %v1579 = vmul.f32 %v364, %v1575
          %v1580 = vmul.f32 %v365, %v1575
          %v1581 = vmul.f32 %v366, %v1575
          %v1582 = vmul.f32 %v367, %v1575
          %v1583 = vmul.f32 %v368, %v1575
          %v1584 = vmul.f32 %v369, %v1575
          %v1585 = vmul.f32 %v370, %v1575
          %v1586 = vmul.f32 %v371, %v1575
          %v1587 = vmul.f32 %v372, %v1575
          %v1588 = vmul.f32 %v373, %v1575
          %v1589 = vmul.f32 %v374, %v1575
          %v1590 = vmul.f32 %v375, %v1575
          %v1591 = vmul.f32 %v376, %v1575
          %v1592 = vmul.f32 %v377, %v1575
          %v1593 = vmul.f32 %v378, %v1575
          %v1594 = vmul.f32 %v379, %v1575
          %v1595 = vmul.f32 %v380, %v1575
          %v1596 = vmul.f32 %v381, %v1575
          %v1597 = vmul.f32 %v382, %v1575
          %v1598 = vmul.f32 %v383, %v1575
          %v1599 = vmul.f32 %v384, %v1575
          %v1600 = vmul.f32 %v385, %v1575
          %v1601 = vmul.f32 %v386, %v1575
          %v1602 = vmul.f32 %v387, %v1575
          %v1603 = vmul.f32 %v388, %v1575
          %v1604 = vmul.f32 %v389, %v1575
          %v1605 = vmul.f32 %v390, %v1575
          %v1606 = vmul.f32 %v391, %v1575
          %v1607 = vmul.f32 %v392, %v1575
          %v1608 = vmul.f32 %v393, %v1575
          %v1609 = vmul.f32 %v394, %v1575
          %v1610 = vmul.f32 %v395, %v1575
          %v1611 = vmul.f32 %v396, %v1575
          %v1612 = vmul.f32 %v397, %v1575
          %v1613 = vmul.f32 %v398, %v1575
          %v1614 = vmul.f32 %v399, %v1575
          %v1615 = vmul.f32 %v400, %v1575
          %v1616 = vmul.f32 %v401, %v1575
          %v1617 = vmul.f32 %v402, %v1575
          %v1618 = vmul.f32 %v403, %v1575
          %v1619 = vmul.f32 %v404, %v1575
          %v1620 = vmul.f32 %v405, %v1575
          %v1621 = vmul.f32 %v406, %v1575
          %v1622 = vmul.f32 %v407, %v1575
          %v1623 = vmul.f32 %v408, %v1575
          %v1672 = vrot.slane %v1576, 2
          %v1673 = vrot.slane %v1577, 2
          %v1674 = vsel %vm1430, %v1672, %v1673
          %v1675 = vrot.slane %v1578, 2
          %v1676 = vsel %vm1430, %v1673, %v1675
          %v1677 = vrot.slane %v1579, 2
          %v1678 = vrot.slane %v1580, 2
          %v1679 = vsel %vm1430, %v1677, %v1678
          %v1680 = vrot.slane %v1581, 2
          %v1681 = vsel %vm1430, %v1678, %v1680
          %v1682 = vrot.slane %v1582, 2
          %v1683 = vrot.slane %v1583, 2
          %v1684 = vsel %vm1430, %v1682, %v1683
          %v1685 = vrot.slane %v1584, 2
          %v1686 = vsel %vm1430, %v1683, %v1685
          %v1687 = vrot.slane %v1585, 2
          %v1688 = vrot.slane %v1586, 2
          %v1689 = vsel %vm1430, %v1687, %v1688
          %v1690 = vrot.slane %v1587, 2
          %v1691 = vsel %vm1430, %v1688, %v1690
          %v1692 = vrot.slane %v1588, 2
          %v1693 = vrot.slane %v1589, 2
          %v1694 = vsel %vm1430, %v1692, %v1693
          %v1695 = vrot.slane %v1590, 2
          %v1696 = vsel %vm1430, %v1693, %v1695
          %v1697 = vrot.slane %v1591, 2
          %v1698 = vrot.slane %v1592, 2
          %v1699 = vsel %vm1430, %v1697, %v1698
          %v1700 = vrot.slane %v1593, 2
          %v1701 = vsel %vm1430, %v1698, %v1700
          %v1702 = vrot.slane %v1594, 2
          %v1703 = vrot.slane %v1595, 2
          %v1704 = vsel %vm1430, %v1702, %v1703
          %v1705 = vrot.slane %v1596, 2
          %v1706 = vsel %vm1430, %v1703, %v1705
          %v1707 = vrot.slane %v1597, 2
          %v1708 = vrot.slane %v1598, 2
          %v1709 = vsel %vm1430, %v1707, %v1708
          %v1710 = vrot.slane %v1599, 2
          %v1711 = vsel %vm1430, %v1708, %v1710
          %v1712 = vrot.slane %v1600, 2
          %v1713 = vrot.slane %v1601, 2
          %v1714 = vsel %vm1430, %v1712, %v1713
          %v1715 = vrot.slane %v1602, 2
          %v1716 = vsel %vm1430, %v1713, %v1715
          %v1717 = vrot.slane %v1603, 2
          %v1718 = vrot.slane %v1604, 2
          %v1719 = vsel %vm1430, %v1717, %v1718
          %v1720 = vrot.slane %v1605, 2
          %v1721 = vsel %vm1430, %v1718, %v1720
          %v1722 = vrot.slane %v1606, 2
          %v1723 = vrot.slane %v1607, 2
          %v1724 = vsel %vm1430, %v1722, %v1723
          %v1725 = vrot.slane %v1608, 2
          %v1726 = vsel %vm1430, %v1723, %v1725
          %v1727 = vrot.slane %v1609, 2
          %v1728 = vrot.slane %v1610, 2
          %v1729 = vsel %vm1430, %v1727, %v1728
          %v1730 = vrot.slane %v1611, 2
          %v1731 = vsel %vm1430, %v1728, %v1730
          %v1732 = vrot.slane %v1612, 2
          %v1733 = vrot.slane %v1613, 2
          %v1734 = vsel %vm1430, %v1732, %v1733
          %v1735 = vrot.slane %v1614, 2
          %v1736 = vsel %vm1430, %v1733, %v1735
          %v1737 = vrot.slane %v1615, 2
          %v1738 = vrot.slane %v1616, 2
          %v1739 = vsel %vm1430, %v1737, %v1738
          %v1740 = vrot.slane %v1617, 2
          %v1741 = vsel %vm1430, %v1738, %v1740
          %v1742 = vrot.slane %v1618, 2
          %v1743 = vrot.slane %v1619, 2
          %v1744 = vsel %vm1430, %v1742, %v1743
          %v1745 = vrot.slane %v1620, 2
          %v1746 = vsel %vm1430, %v1743, %v1745
          %v1747 = vrot.slane %v1621, 2
          %v1748 = vrot.slane %v1622, 2
          %v1749 = vsel %vm1430, %v1747, %v1748
          %v1750 = vrot.slane %v1623, 2
          %v1751 = vsel %vm1430, %v1748, %v1750
          %v1784 = vadd.f32 %v1543, %v1674
          %v1785 = vadd.f32 %v1544, %v1676
          %v1786 = vadd.f32 %v1545, %v1679
          %v1787 = vadd.f32 %v1546, %v1681
          %v1788 = vadd.f32 %v1547, %v1684
          %v1789 = vadd.f32 %v1548, %v1686
          %v1790 = vadd.f32 %v1549, %v1689
          %v1791 = vadd.f32 %v1550, %v1691
          %v1792 = vadd.f32 %v1551, %v1694
          %v1793 = vadd.f32 %v1552, %v1696
          %v1794 = vadd.f32 %v1553, %v1699
          %v1795 = vadd.f32 %v1554, %v1701
          %v1796 = vadd.f32 %v1555, %v1704
          %v1797 = vadd.f32 %v1556, %v1706
          %v1798 = vadd.f32 %v1557, %v1709
          %v1799 = vadd.f32 %v1558, %v1711
          %v1800 = vadd.f32 %v1559, %v1714
          %v1801 = vadd.f32 %v1560, %v1716
          %v1802 = vadd.f32 %v1561, %v1719
          %v1803 = vadd.f32 %v1562, %v1721
          %v1804 = vadd.f32 %v1563, %v1724
          %v1805 = vadd.f32 %v1564, %v1726
          %v1806 = vadd.f32 %v1565, %v1729
          %v1807 = vadd.f32 %v1566, %v1731
          %v1808 = vadd.f32 %v1567, %v1734
          %v1809 = vadd.f32 %v1568, %v1736
          %v1810 = vadd.f32 %v1569, %v1739
          %v1811 = vadd.f32 %v1570, %v1741
          %v1812 = vadd.f32 %v1571, %v1744
          %v1813 = vadd.f32 %v1572, %v1746
          %v1814 = vadd.f32 %v1573, %v1749
          %v1815 = vadd.f32 %v1574, %v1751
          %v1816 = vperm.slane %v413, 0
          %v1817 = vmul.f32 %v364, %v1816
          %v1818 = vmul.f32 %v365, %v1816
          %v1819 = vmul.f32 %v366, %v1816
          %v1820 = vmul.f32 %v367, %v1816
          %v1821 = vmul.f32 %v368, %v1816
          %v1822 = vmul.f32 %v369, %v1816
          %v1823 = vmul.f32 %v370, %v1816
          %v1824 = vmul.f32 %v371, %v1816
          %v1825 = vmul.f32 %v372, %v1816
          %v1826 = vmul.f32 %v373, %v1816
          %v1827 = vmul.f32 %v374, %v1816
          %v1828 = vmul.f32 %v375, %v1816
          %v1829 = vmul.f32 %v376, %v1816
          %v1830 = vmul.f32 %v377, %v1816
          %v1831 = vmul.f32 %v378, %v1816
          %v1832 = vmul.f32 %v379, %v1816
          %v1833 = vmul.f32 %v380, %v1816
          %v1834 = vmul.f32 %v381, %v1816
          %v1835 = vmul.f32 %v382, %v1816
          %v1836 = vmul.f32 %v383, %v1816
          %v1837 = vmul.f32 %v384, %v1816
          %v1838 = vmul.f32 %v385, %v1816
          %v1839 = vmul.f32 %v386, %v1816
          %v1840 = vmul.f32 %v387, %v1816
          %v1841 = vmul.f32 %v388, %v1816
          %v1842 = vmul.f32 %v389, %v1816
          %v1843 = vmul.f32 %v390, %v1816
          %v1844 = vmul.f32 %v391, %v1816
          %v1845 = vmul.f32 %v392, %v1816
          %v1846 = vmul.f32 %v393, %v1816
          %v1847 = vmul.f32 %v394, %v1816
          %v1848 = vmul.f32 %v395, %v1816
          %v1849 = vmul.f32 %v396, %v1816
          %v1850 = vmul.f32 %v397, %v1816
          %v1851 = vmul.f32 %v398, %v1816
          %v1852 = vmul.f32 %v399, %v1816
          %v1853 = vmul.f32 %v400, %v1816
          %v1854 = vmul.f32 %v401, %v1816
          %v1855 = vmul.f32 %v402, %v1816
          %v1856 = vmul.f32 %v403, %v1816
          %v1857 = vmul.f32 %v404, %v1816
          %v1858 = vmul.f32 %v405, %v1816
          %v1859 = vmul.f32 %v406, %v1816
          %v1860 = vmul.f32 %v407, %v1816
          %v1861 = vmul.f32 %v408, %v1816
          %v1862 = vmul.f32 %v409, %v1816
          %v1863 = vmul.f32 %v410, %v1816
          %v1864 = vmul.f32 %v411, %v1816
          %v1913 = vrot.slane %v1817, 2
          %v1914 = vrot.slane %v1818, 2
          %v1915 = vsel %vm1430, %v1913, %v1914
          %v1916 = vrot.slane %v1819, 2
          %v1917 = vsel %vm1430, %v1914, %v1916
          %v1918 = vrot.slane %v1820, 2
          %v1919 = vrot.slane %v1821, 2
          %v1920 = vsel %vm1430, %v1918, %v1919
          %v1921 = vrot.slane %v1822, 2
          %v1922 = vsel %vm1430, %v1919, %v1921
          %v1923 = vrot.slane %v1823, 2
          %v1924 = vrot.slane %v1824, 2
          %v1925 = vsel %vm1430, %v1923, %v1924
          %v1926 = vrot.slane %v1825, 2
          %v1927 = vsel %vm1430, %v1924, %v1926
          %v1928 = vrot.slane %v1826, 2
          %v1929 = vrot.slane %v1827, 2
          %v1930 = vsel %vm1430, %v1928, %v1929
          %v1931 = vrot.slane %v1828, 2
          %v1932 = vsel %vm1430, %v1929, %v1931
          %v1933 = vrot.slane %v1829, 2
          %v1934 = vrot.slane %v1830, 2
          %v1935 = vsel %vm1430, %v1933, %v1934
          %v1936 = vrot.slane %v1831, 2
          %v1937 = vsel %vm1430, %v1934, %v1936
          %v1938 = vrot.slane %v1832, 2
          %v1939 = vrot.slane %v1833, 2
          %v1940 = vsel %vm1430, %v1938, %v1939
          %v1941 = vrot.slane %v1834, 2
          %v1942 = vsel %vm1430, %v1939, %v1941
          %v1943 = vrot.slane %v1835, 2
          %v1944 = vrot.slane %v1836, 2
          %v1945 = vsel %vm1430, %v1943, %v1944
          %v1946 = vrot.slane %v1837, 2
          %v1947 = vsel %vm1430, %v1944, %v1946
          %v1948 = vrot.slane %v1838, 2
          %v1949 = vrot.slane %v1839, 2
          %v1950 = vsel %vm1430, %v1948, %v1949
          %v1951 = vrot.slane %v1840, 2
          %v1952 = vsel %vm1430, %v1949, %v1951
          %v1953 = vrot.slane %v1841, 2
          %v1954 = vrot.slane %v1842, 2
          %v1955 = vsel %vm1430, %v1953, %v1954
          %v1956 = vrot.slane %v1843, 2
          %v1957 = vsel %vm1430, %v1954, %v1956
          %v1958 = vrot.slane %v1844, 2
          %v1959 = vrot.slane %v1845, 2
          %v1960 = vsel %vm1430, %v1958, %v1959
          %v1961 = vrot.slane %v1846, 2
          %v1962 = vsel %vm1430, %v1959, %v1961
          %v1963 = vrot.slane %v1847, 2
          %v1964 = vrot.slane %v1848, 2
          %v1965 = vsel %vm1430, %v1963, %v1964
          %v1966 = vrot.slane %v1849, 2
          %v1967 = vsel %vm1430, %v1964, %v1966
          %v1968 = vrot.slane %v1850, 2
          %v1969 = vrot.slane %v1851, 2
          %v1970 = vsel %vm1430, %v1968, %v1969
          %v1971 = vrot.slane %v1852, 2
          %v1972 = vsel %vm1430, %v1969, %v1971
          %v1973 = vrot.slane %v1853, 2
          %v1974 = vrot.slane %v1854, 2
          %v1975 = vsel %vm1430, %v1973, %v1974
          %v1976 = vrot.slane %v1855, 2
          %v1977 = vsel %vm1430, %v1974, %v1976
          %v1978 = vrot.slane %v1856, 2
          %v1979 = vrot.slane %v1857, 2
          %v1980 = vsel %vm1430, %v1978, %v1979
          %v1981 = vrot.slane %v1858, 2
          %v1982 = vsel %vm1430, %v1979, %v1981
          %v1983 = vrot.slane %v1859, 2
          %v1984 = vrot.slane %v1860, 2
          %v1985 = vsel %vm1430, %v1983, %v1984
          %v1986 = vrot.slane %v1861, 2
          %v1987 = vsel %vm1430, %v1984, %v1986
          %v1988 = vrot.slane %v1862, 2
          %v1989 = vrot.slane %v1863, 2
          %v1990 = vsel %vm1430, %v1988, %v1989
          %v1991 = vrot.slane %v1864, 2
          %v1992 = vsel %vm1430, %v1989, %v1991
          %v2025 = vadd.f32 %v1784, %v1915
          %v2026 = vadd.f32 %v1785, %v1917
          %v2027 = vadd.f32 %v1786, %v1920
          %v2028 = vadd.f32 %v1787, %v1922
          %v2029 = vadd.f32 %v1788, %v1925
          %v2030 = vadd.f32 %v1789, %v1927
          %v2031 = vadd.f32 %v1790, %v1930
          %v2032 = vadd.f32 %v1791, %v1932
          %v2033 = vadd.f32 %v1792, %v1935
          %v2034 = vadd.f32 %v1793, %v1937
          %v2035 = vadd.f32 %v1794, %v1940
          %v2036 = vadd.f32 %v1795, %v1942
          %v2037 = vadd.f32 %v1796, %v1945
          %v2038 = vadd.f32 %v1797, %v1947
          %v2039 = vadd.f32 %v1798, %v1950
          %v2040 = vadd.f32 %v1799, %v1952
          %v2041 = vadd.f32 %v1800, %v1955
          %v2042 = vadd.f32 %v1801, %v1957
          %v2043 = vadd.f32 %v1802, %v1960
          %v2044 = vadd.f32 %v1803, %v1962
          %v2045 = vadd.f32 %v1804, %v1965
          %v2046 = vadd.f32 %v1805, %v1967
          %v2047 = vadd.f32 %v1806, %v1970
          %v2048 = vadd.f32 %v1807, %v1972
          %v2049 = vadd.f32 %v1808, %v1975
          %v2050 = vadd.f32 %v1809, %v1977
          %v2051 = vadd.f32 %v1810, %v1980
          %v2052 = vadd.f32 %v1811, %v1982
          %v2053 = vadd.f32 %v1812, %v1985
          %v2054 = vadd.f32 %v1813, %v1987
          %v2055 = vadd.f32 %v1814, %v1990
          %v2056 = vadd.f32 %v1815, %v1992
          %v2057 = vpack.c.bf16 %v2025, %v2025
          %v2058 = vpack.c.bf16 %v2026, %v2026
          %v2059 = vpack.c.bf16 %v2027, %v2027
          %v2060 = vpack.c.bf16 %v2028, %v2028
          %v2061 = vpack.c.bf16 %v2029, %v2029
          %v2062 = vpack.c.bf16 %v2030, %v2030
          %v2063 = vpack.c.bf16 %v2031, %v2031
          %v2064 = vpack.c.bf16 %v2032, %v2032
          %v2065 = vpack.c.bf16 %v2033, %v2033
          %v2066 = vpack.c.bf16 %v2034, %v2034
          %v2067 = vpack.c.bf16 %v2035, %v2035
          %v2068 = vpack.c.bf16 %v2036, %v2036
          %v2069 = vpack.c.bf16 %v2037, %v2037
          %v2070 = vpack.c.bf16 %v2038, %v2038
          %v2071 = vpack.c.bf16 %v2039, %v2039
          %v2072 = vpack.c.bf16 %v2040, %v2040
          %v2073 = vpack.c.bf16 %v2041, %v2041
          %v2074 = vpack.c.bf16 %v2042, %v2042
          %v2075 = vpack.c.bf16 %v2043, %v2043
          %v2076 = vpack.c.bf16 %v2044, %v2044
          %v2077 = vpack.c.bf16 %v2045, %v2045
          %v2078 = vpack.c.bf16 %v2046, %v2046
          %v2079 = vpack.c.bf16 %v2047, %v2047
          %v2080 = vpack.c.bf16 %v2048, %v2048
          %v2081 = vpack.c.bf16 %v2049, %v2049
          %v2082 = vpack.c.bf16 %v2050, %v2050
          %v2083 = vpack.c.bf16 %v2051, %v2051
          %v2084 = vpack.c.bf16 %v2052, %v2052
          %v2085 = vpack.c.bf16 %v2053, %v2053
          %v2086 = vpack.c.bf16 %v2054, %v2054
          %v2087 = vpack.c.bf16 %v2055, %v2055
          %v2088 = vpack.c.bf16 %v2056, %v2056
          %vm2089 = vcmask 257024
          %2090 = vst.msk [vmem:[#allocation2] sm:$0xf] %vm2089, %v2057
          %2091 = vst.msk [vmem:[#allocation2 + $0x4] sm:$0xf] %vm2089, %v2058
          %2092 = vst.msk [vmem:[#allocation2 + $0x8] sm:$0xf] %vm2089, %v2059
          %2093 = vst.msk [vmem:[#allocation2 + $0xc] sm:$0xf] %vm2089, %v2060
          %2094 = vst.msk [vmem:[#allocation2 + $0x10] sm:$0xf] %vm2089, %v2061
          %2095 = vst.msk [vmem:[#allocation2 + $0x14] sm:$0xf] %vm2089, %v2062
          %2096 = vst.msk [vmem:[#allocation2 + $0x18] sm:$0xf] %vm2089, %v2063
          %2097 = vst.msk [vmem:[#allocation2 + $0x1c] sm:$0xf] %vm2089, %v2064
          %2098 = vst.msk [vmem:[#allocation2 + $0x20] sm:$0xf] %vm2089, %v2065
          %2099 = vst.msk [vmem:[#allocation2 + $0x24] sm:$0xf] %vm2089, %v2066
          %2100 = vst.msk [vmem:[#allocation2 + $0x28] sm:$0xf] %vm2089, %v2067
          %2101 = vst.msk [vmem:[#allocation2 + $0x2c] sm:$0xf] %vm2089, %v2068
          %2102 = vst.msk [vmem:[#allocation2 + $0x30] sm:$0xf] %vm2089, %v2069
          %2103 = vst.msk [vmem:[#allocation2 + $0x34] sm:$0xf] %vm2089, %v2070
          %2104 = vst.msk [vmem:[#allocation2 + $0x38] sm:$0xf] %vm2089, %v2071
          %2105 = vst.msk [vmem:[#allocation2 + $0x3c] sm:$0xf] %vm2089, %v2072
          %2106 = vst.msk [vmem:[#allocation2 + $0x40] sm:$0xf] %vm2089, %v2073
          %2107 = vst.msk [vmem:[#allocation2 + $0x44] sm:$0xf] %vm2089, %v2074
          %2108 = vst.msk [vmem:[#allocation2 + $0x48] sm:$0xf] %vm2089, %v2075
          %2109 = vst.msk [vmem:[#allocation2 + $0x4c] sm:$0xf] %vm2089, %v2076
          %2110 = vst.msk [vmem:[#allocation2 + $0x50] sm:$0xf] %vm2089, %v2077
          %2111 = vst.msk [vmem:[#allocation2 + $0x54] sm:$0xf] %vm2089, %v2078
          %2112 = vst.msk [vmem:[#allocation2 + $0x58] sm:$0xf] %vm2089, %v2079
          %2113 = vst.msk [vmem:[#allocation2 + $0x5c] sm:$0xf] %vm2089, %v2080
          %2114 = vst.msk [vmem:[#allocation2 + $0x60] sm:$0xf] %vm2089, %v2081
          %2115 = vst.msk [vmem:[#allocation2 + $0x64] sm:$0xf] %vm2089, %v2082
          %2116 = vst.msk [vmem:[#allocation2 + $0x68] sm:$0xf] %vm2089, %v2083
          %2117 = vst.msk [vmem:[#allocation2 + $0x6c] sm:$0xf] %vm2089, %v2084
          %2118 = vst.msk [vmem:[#allocation2 + $0x70] sm:$0xf] %vm2089, %v2085
          %2119 = vst.msk [vmem:[#allocation2 + $0x74] sm:$0xf] %vm2089, %v2086
          %2120 = vst.msk [vmem:[#allocation2 + $0x78] sm:$0xf] %vm2089, %v2087
          %2121 = vst.msk [vmem:[#allocation2 + $0x7c] sm:$0xf] %vm2089, %v2088
        $region81: #{tpu_custom_call.1} parent=72 // pred_fallthru
          _
        %v2122 = vld [vmem:[#allocation2] sm:$0xf]
        %v2123 = vld [vmem:[#allocation2 + $0x4] sm:$0xf]
        %v2124 = vld [vmem:[#allocation2 + $0x8] sm:$0xf]
        %v2125 = vld [vmem:[#allocation2 + $0xc] sm:$0xf]
        %v2126 = vld [vmem:[#allocation2 + $0x10] sm:$0xf]
        %v2127 = vld [vmem:[#allocation2 + $0x14] sm:$0xf]
        %v2128 = vld [vmem:[#allocation2 + $0x18] sm:$0xf]
        %v2129 = vld [vmem:[#allocation2 + $0x1c] sm:$0xf]
        %v2130 = vld [vmem:[#allocation2 + $0x20] sm:$0xf]
        %v2131 = vld [vmem:[#allocation2 + $0x24] sm:$0xf]
        %v2132 = vld [vmem:[#allocation2 + $0x28] sm:$0xf]
        %v2133 = vld [vmem:[#allocation2 + $0x2c] sm:$0xf]
        %v2134 = vld [vmem:[#allocation2 + $0x30] sm:$0xf]
        %v2135 = vld [vmem:[#allocation2 + $0x34] sm:$0xf]
        %v2136 = vld [vmem:[#allocation2 + $0x38] sm:$0xf]
        %v2137 = vld [vmem:[#allocation2 + $0x3c] sm:$0xf]
        %v2138 = vld [vmem:[#allocation2 + $0x40] sm:$0xf]
        %v2139 = vld [vmem:[#allocation2 + $0x44] sm:$0xf]
        %v2140 = vld [vmem:[#allocation2 + $0x48] sm:$0xf]
        %v2141 = vld [vmem:[#allocation2 + $0x4c] sm:$0xf]
        %v2142 = vld [vmem:[#allocation2 + $0x50] sm:$0xf]
        %v2143 = vld [vmem:[#allocation2 + $0x54] sm:$0xf]
        %v2144 = vld [vmem:[#allocation2 + $0x58] sm:$0xf]
        %v2145 = vld [vmem:[#allocation2 + $0x5c] sm:$0xf]
        %v2146 = vld [vmem:[#allocation2 + $0x60] sm:$0xf]
        %v2147 = vld [vmem:[#allocation2 + $0x64] sm:$0xf]
        %v2148 = vld [vmem:[#allocation2 + $0x68] sm:$0xf]
        %v2149 = vld [vmem:[#allocation2 + $0x6c] sm:$0xf]
        %v2150 = vld [vmem:[#allocation2 + $0x70] sm:$0xf]
        %v2151 = vld [vmem:[#allocation2 + $0x74] sm:$0xf]
        %v2152 = vld [vmem:[#allocation2 + $0x78] sm:$0xf]
        %v2153 = vld [vmem:[#allocation2 + $0x7c] sm:$0xf]
        %v2154 = vld [vmem:[%s260] sm:$0xf]
        %v2155 = vld [vmem:[%s260 + $0x4] sm:$0xf]
        %v2156 = vld [vmem:[%s260 + $0x8] sm:$0xf]
        %v2157 = vld [vmem:[%s260 + $0xc] sm:$0xf]
        %v2158 = vld [vmem:[%s298] sm:$0x1]
        %v2160 = vperm.slane %v2158, 0
        %v2194 = vunpack.c.l.b16 %v2122
        %v2195 = vunpack.c.l.b16 %v2123
        %v2196 = vunpack.c.l.b16 %v2124
        %v2197 = vunpack.c.l.b16 %v2125
        %v2198 = vunpack.c.l.b16 %v2126
        %v2199 = vunpack.c.l.b16 %v2127
        %v2200 = vunpack.c.l.b16 %v2128
        %v2201 = vunpack.c.l.b16 %v2129
        %v2202 = vunpack.c.l.b16 %v2130
        %v2203 = vunpack.c.l.b16 %v2131
        %v2204 = vunpack.c.l.b16 %v2132
        %v2205 = vunpack.c.l.b16 %v2133
        %v2206 = vunpack.c.l.b16 %v2134
        %v2207 = vunpack.c.l.b16 %v2135
        %v2208 = vunpack.c.l.b16 %v2136
        %v2209 = vunpack.c.l.b16 %v2137
        %v2210 = vunpack.c.l.b16 %v2138
        %v2211 = vunpack.c.l.b16 %v2139
        %v2212 = vunpack.c.l.b16 %v2140
        %v2213 = vunpack.c.l.b16 %v2141
        %v2214 = vunpack.c.l.b16 %v2142
        %v2215 = vunpack.c.l.b16 %v2143
        %v2216 = vunpack.c.l.b16 %v2144
        %v2217 = vunpack.c.l.b16 %v2145
        %v2218 = vunpack.c.l.b16 %v2146
        %v2219 = vunpack.c.l.b16 %v2147
        %v2220 = vunpack.c.l.b16 %v2148
        %v2221 = vunpack.c.l.b16 %v2149
        %v2222 = vunpack.c.l.b16 %v2150
        %v2223 = vunpack.c.l.b16 %v2151
        %v2224 = vunpack.c.l.b16 %v2152
        %v2225 = vunpack.c.l.b16 %v2153
        %v2226 = vpack.c.b16 %v2195, %v2194
        %v2227 = vpack.c.b16 %v2197, %v2196
        %v2228 = vpack.c.b16 %v2199, %v2198
        %v2229 = vpack.c.b16 %v2201, %v2200
        %v2230 = vpack.c.b16 %v2203, %v2202
        %v2231 = vpack.c.b16 %v2205, %v2204
        %v2232 = vpack.c.b16 %v2207, %v2206
        %v2233 = vpack.c.b16 %v2209, %v2208
        %v2234 = vpack.c.b16 %v2211, %v2210
        %v2235 = vpack.c.b16 %v2213, %v2212
        %v2236 = vpack.c.b16 %v2215, %v2214
        %v2237 = vpack.c.b16 %v2217, %v2216
        %v2238 = vpack.c.b16 %v2219, %v2218
        %v2239 = vpack.c.b16 %v2221, %v2220
        %v2240 = vpack.c.b16 %v2223, %v2222
        %v2241 = vpack.c.b16 %v2225, %v2224
        %v2246 = vunpack.c.l.b16 %v2154
        %v2247 = vunpack.c.l.b16 %v2155
        %v2248 = vunpack.c.l.b16 %v2156
        %v2249 = vunpack.c.l.b16 %v2157
        %v2250 = vpack.c.b16 %v2247, %v2246
        %v2251 = vpack.c.b16 %v2249, %v2248
        %vm2254 = vcmask 261120
        %v2256 = vsel %vm2254, %v2226, 0
        %v2259 = vsel %vm2254, %v2227, 0
        %v2262 = vsel %vm2254, %v2228, 0
        %v2265 = vsel %vm2254, %v2229, 0
        %v2268 = vsel %vm2254, %v2230, 0
        %v2271 = vsel %vm2254, %v2231, 0
        %v2274 = vsel %vm2254, %v2232, 0
        %v2277 = vsel %vm2254, %v2233, 0
        %v2280 = vsel %vm2254, %v2234, 0
        %v2283 = vsel %vm2254, %v2235, 0
        %v2286 = vsel %vm2254, %v2236, 0
        %v2289 = vsel %vm2254, %v2237, 0
        %v2292 = vsel %vm2254, %v2238, 0
        %v2295 = vsel %vm2254, %v2239, 0
        %v2298 = vsel %vm2254, %v2240, 0
        %v2301 = vsel %vm2254, %v2241, 0
        %2303 = vmatpush.bf16.msra.mxu0 0
        %2304 = vmatpush.bf16.msra.mxu0 0
        %2305 = vmatpush.bf16.msra.mxu0 0
        %2306 = vmatpush.bf16.msra.mxu0 0
        %2307 = vmatpush.bf16.msra.mxu0 0
        %2308 = vmatpush.bf16.msra.mxu0 0
        %2309 = vmatpush.bf16.msra.mxu0 %v2251
        %2310 = vmatpush.bf16.msra.mxu0 %v2250
        %2311 = vmatmul.bf16.gmra.mxu0 %v2256
        %v2312 = vpop.f32.mrf.mxu0
        %v2313 = vadd.f32 %v2160, %v2312
        %v2314 = vpop.f32.mrf.mxu0
        %v2315 = vadd.f32 %v2160, %v2314
        %2316 = vmatmul.bf16.gmra.mxu0 %v2259
        %v2317 = vpop.f32.mrf.mxu0
        %v2318 = vadd.f32 %v2160, %v2317
        %v2319 = vpop.f32.mrf.mxu0
        %v2320 = vadd.f32 %v2160, %v2319
        %2321 = vmatmul.bf16.gmra.mxu0 %v2262
        %v2322 = vpop.f32.mrf.mxu0
        %v2323 = vadd.f32 %v2160, %v2322
        %v2324 = vpop.f32.mrf.mxu0
        %v2325 = vadd.f32 %v2160, %v2324
        %2326 = vmatmul.bf16.gmra.mxu0 %v2265
        %v2327 = vpop.f32.mrf.mxu0
        %v2328 = vadd.f32 %v2160, %v2327
        %v2329 = vpop.f32.mrf.mxu0
        %v2330 = vadd.f32 %v2160, %v2329
        %2331 = vmatmul.bf16.gmra.mxu0 %v2268
        %v2332 = vpop.f32.mrf.mxu0
        %v2333 = vadd.f32 %v2160, %v2332
        %v2334 = vpop.f32.mrf.mxu0
        %v2335 = vadd.f32 %v2160, %v2334
        %2336 = vmatmul.bf16.gmra.mxu0 %v2271
        %v2337 = vpop.f32.mrf.mxu0
        %v2338 = vadd.f32 %v2160, %v2337
        %v2339 = vpop.f32.mrf.mxu0
        %v2340 = vadd.f32 %v2160, %v2339
        %2341 = vmatmul.bf16.gmra.mxu0 %v2274
        %v2342 = vpop.f32.mrf.mxu0
        %v2343 = vadd.f32 %v2160, %v2342
        %v2344 = vpop.f32.mrf.mxu0
        %v2345 = vadd.f32 %v2160, %v2344
        %2346 = vmatmul.bf16.gmra.mxu0 %v2277
        %v2347 = vpop.f32.mrf.mxu0
        %v2348 = vadd.f32 %v2160, %v2347
        %v2349 = vpop.f32.mrf.mxu0
        %v2350 = vadd.f32 %v2160, %v2349
        %2351 = vmatmul.bf16.gmra.mxu0 %v2280
        %v2352 = vpop.f32.mrf.mxu0
        %v2353 = vadd.f32 %v2160, %v2352
        %v2354 = vpop.f32.mrf.mxu0
        %v2355 = vadd.f32 %v2160, %v2354
        %2356 = vmatmul.bf16.gmra.mxu0 %v2283
        %v2357 = vpop.f32.mrf.mxu0
        %v2358 = vadd.f32 %v2160, %v2357
        %v2359 = vpop.f32.mrf.mxu0
        %v2360 = vadd.f32 %v2160, %v2359
        %2361 = vmatmul.bf16.gmra.mxu0 %v2286
        %v2362 = vpop.f32.mrf.mxu0
        %v2363 = vadd.f32 %v2160, %v2362
        %v2364 = vpop.f32.mrf.mxu0
        %v2365 = vadd.f32 %v2160, %v2364
        %2366 = vmatmul.bf16.gmra.mxu0 %v2289
        %v2367 = vpop.f32.mrf.mxu0
        %v2368 = vadd.f32 %v2160, %v2367
        %v2369 = vpop.f32.mrf.mxu0
        %v2370 = vadd.f32 %v2160, %v2369
        %2371 = vmatmul.bf16.gmra.mxu0 %v2292
        %v2372 = vpop.f32.mrf.mxu0
        %v2373 = vadd.f32 %v2160, %v2372
        %v2374 = vpop.f32.mrf.mxu0
        %v2375 = vadd.f32 %v2160, %v2374
        %2376 = vmatmul.bf16.gmra.mxu0 %v2295
        %v2377 = vpop.f32.mrf.mxu0
        %v2378 = vadd.f32 %v2160, %v2377
        %v2379 = vpop.f32.mrf.mxu0
        %v2380 = vadd.f32 %v2160, %v2379
        %2381 = vmatmul.bf16.gmra.mxu0 %v2298
        %v2382 = vpop.f32.mrf.mxu0
        %v2383 = vadd.f32 %v2160, %v2382
        %v2384 = vpop.f32.mrf.mxu0
        %v2385 = vadd.f32 %v2160, %v2384
        %2386 = vmatmul.bf16.gmra.mxu0 %v2301
        %v2387 = vpop.f32.mrf.mxu0
        %v2388 = vadd.f32 %v2160, %v2387
        %v2389 = vpop.f32.mrf.mxu0
        %v2390 = vadd.f32 %v2160, %v2389
        %2391 = vdwg.mxu0
        %2392 = vst [vmem:[%s290] sm:$0xff] %v2313
        %2393 = vst [vmem:[%s290 + $0x8] sm:$0xff] %v2315
        %2394 = vst [vmem:[%s290 + $0x10] sm:$0xff] %v2318
        %2395 = vst [vmem:[%s290 + $0x18] sm:$0xff] %v2320
        %2396 = vst [vmem:[%s290 + $0x20] sm:$0xff] %v2323
        %2397 = vst [vmem:[%s290 + $0x28] sm:$0xff] %v2325
        %2398 = vst [vmem:[%s290 + $0x30] sm:$0xff] %v2328
        %2399 = vst [vmem:[%s290 + $0x38] sm:$0xff] %v2330
        %2400 = vst [vmem:[%s290 + $0x40] sm:$0xff] %v2333
        %2401 = vst [vmem:[%s290 + $0x48] sm:$0xff] %v2335
        %2402 = vst [vmem:[%s290 + $0x50] sm:$0xff] %v2338
        %2403 = vst [vmem:[%s290 + $0x58] sm:$0xff] %v2340
        %2404 = vst [vmem:[%s290 + $0x60] sm:$0xff] %v2343
        %2405 = vst [vmem:[%s290 + $0x68] sm:$0xff] %v2345
        %2406 = vst [vmem:[%s290 + $0x70] sm:$0xff] %v2348
        %2407 = vst [vmem:[%s290 + $0x78] sm:$0xff] %v2350
        %2408 = vst [vmem:[%s290 + $0x80] sm:$0xff] %v2353
        %2409 = vst [vmem:[%s290 + $0x88] sm:$0xff] %v2355
        %2410 = vst [vmem:[%s290 + $0x90] sm:$0xff] %v2358
        %2411 = vst [vmem:[%s290 + $0x98] sm:$0xff] %v2360
        %2412 = vst [vmem:[%s290 + $0xa0] sm:$0xff] %v2363
        %2413 = vst [vmem:[%s290 + $0xa8] sm:$0xff] %v2365
        %2414 = vst [vmem:[%s290 + $0xb0] sm:$0xff] %v2368
        %2415 = vst [vmem:[%s290 + $0xb8] sm:$0xff] %v2370
        %2416 = vst [vmem:[%s290 + $0xc0] sm:$0xff] %v2373
        %2417 = vst [vmem:[%s290 + $0xc8] sm:$0xff] %v2375
        %2418 = vst [vmem:[%s290 + $0xd0] sm:$0xff] %v2378
        %2419 = vst [vmem:[%s290 + $0xd8] sm:$0xff] %v2380
        %2420 = vst [vmem:[%s290 + $0xe0] sm:$0xff] %v2383
        %2421 = vst [vmem:[%s290 + $0xe8] sm:$0xff] %v2385
        %2422 = vst [vmem:[%s290 + $0xf0] sm:$0xff] %v2388
        %2423 = vst [vmem:[%s290 + $0xf8] sm:$0xff] %v2390
        %s2424 = sand.u32 %s139, 1
        %s2425 = scalar_lea.sflag [#allocation5], %s2424
        %s2426 = sand.u32 %s139, 1
        %s2427 = smul.addr %s2426, 256
        %s2428 = scalar_lea.vmem [#allocation4], %s2427
        // Predicated region
        $region82: #{tpu_custom_call.1} parent=72 // pred_check
          %p2429 = pneg %p149
        $region83: #{tpu_custom_call.1} parent=72 // pred_check_branch
          %2431 = sbr.rel (%p2429) target = $region85
        $region84: #{tpu_custom_call.1} parent=72 // pred_region
          %2433 = vsyncadd %s2425, 0
          %s2434 = smul.addr %s22, 64
          %s2435 = sadd.s32 %s23, %s2434
          %s2436 = smul.addr %s2435, 8
          %s2437 = scalar_lea.hbm %s4, %s2436
          %s2438 = sshll.u32 %s2428, 4
          %s2439 = int_to_ptr.vmem [resolvable:$true] %s2438
          %s2440 = sshll.u32 %s2437, 4
          %s2441 = int_to_ptr.hbm [resolvable:$true] %s2440
          %2446 = dma.vmem_to_hbm [thread:$0]  %s2439, 4096, %s2441, %s2425, 128, 256, 8
        $region85: #{tpu_custom_call.1} parent=72 // pred_fallthru
          _
      $region73: #{tpu_custom_call.1} parent=5 // pred_fallthru
        _
      %p2447 = scmp.le.s32.totalorder 2, %s13
      // Predicated region
      $region86: #{tpu_custom_call.1} parent=5 // pred_check
        %p2448 = pneg %p2447
      $region87: #{tpu_custom_call.1} parent=5 // pred_check_branch
        %2450 = sbr.rel (%p2448) target = $region89
      $region88: #{tpu_custom_call.1} parent=5 // pred_region
        %s2451 = ssub.s32 %s13, 2
        // Predicated region
        $region90: #{tpu_custom_call.1} parent=88 // pred_check
          %p2452 = pneg %p155
        $region91: #{tpu_custom_call.1} parent=88 // pred_check_branch
          %2454 = sbr.rel (%p2452) target = $region93
        $region92: #{tpu_custom_call.1} parent=88 // pred_region
          %s2455 = sand.u32 %s140, 1
          %s2456 = scalar_lea.sflag [#allocation5], %s2455
          %s2457 = sand.u32 %s140, 1
          %s2458 = smul.addr %s2457, 256
          %s2459 = scalar_lea.vmem [#allocation4], %s2458
          %2461 = dma.done %s2456, 4096
        $region93: #{tpu_custom_call.1} parent=88 // pred_fallthru
          _
      $region89: #{tpu_custom_call.1} parent=5 // pred_fallthru
        _
    $region6: #{tpu_custom_call.1} parent=1 // loop_footer
      %s17 = sadd.s32 1, %s13
    $region7: #{tpu_custom_call.1} parent=1 // loop_footer_branch
      %12 = sbr.rel target = $region3
    $region8: #{tpu_custom_call.1} parent=1 // loop_exit
      _
    %2462 = vsyncpa [#allocation5], 1
    %s2463 = scalar_lea.sflag [#allocation5], 1
    %2464 = vsyncpa %s2463, 1

</llo_original>
